<compile_context>
chip_gen: v5e
topology: v5e:2x2
jax: 0.10.0
libtpu: 0.0.40
codegen_flags: <defaults>
</compile_context>

<pallas_src>
import functools

import jax
import jax.numpy as jnp
from jax import lax
from jax.experimental import pallas as pl
from jax.experimental.pallas import tpu as pltpu

_MIB = 1024 * 1024


def _round_up(x, m):
    return ((x + m - 1) // m) * m


def _vmem_capacity_bytes():
    """Per-core VMEM capacity; conservative 64 MiB fallback (v7x per-TC)."""
    try:
        cap = getattr(pltpu.get_tpu_info(), "vmem_capacity_bytes", None)
        if cap:
            return int(cap)
    except Exception:
        pass
    return 64 * _MIB


def _chunk_footprint_bytes(Tc, B_pad, H, n_out):
    """Conservative per-grid-step VMEM footprint (assumes double-buffered I/O)."""
    z_b = 2 * Tc * B_pad * H * 2                        # z chunk (bf16, 2 bufs)
    out_b = 2 * Tc * B_pad * n_out * 4                  # out chunk (f32, 2 bufs)
    gx_b = Tc * B_pad * 4 * H * 4                       # hoisted x-gates scratch (f32)
    w_b = 2 * (2 * H * 4 * H * 2 + H * n_out * 2        # LSTM + FC weights (bf16)
               + 4 * H * 4 + n_out * 4)                 # biases (f32)
    st_b = 4 * B_pad * H * 4                            # h/c scratch + hlast output
    return z_b + out_b + gx_b + w_b + st_b


def _pick_time_chunk(T, B_pad, H, n_out, budget_bytes):
    """Largest multiple-of-8 chunk dividing T that fits the VMEM budget."""
    for c in (512, 256, 128, 64, 32, 16, 8):
        if T % c == 0 and _chunk_footprint_bytes(c, B_pad, H, n_out) <= budget_bytes:
            return c
    return T


def _pinned_spec(shape):
    """Constant-index weight block; single-buffered when the jax version allows."""
    index_map = lambda ti: (0,) * len(shape)
    try:
        return pl.BlockSpec(shape, index_map, pipeline_mode=pl.Buffered(1))
    except Exception:  # older jax without pipeline_mode / Buffered
        return pl.BlockSpec(shape, index_map)


def _decoder_kernel(z_ref, wih_ref, whh_ref, b_ref, wfc_ref, bfc_ref,
                    out_ref, hlast_ref,
                    h_scr, c_scr, gx_scr,
                    *, hidden_size, batch_pad, use_act, unroll):
    """Processes one T-chunk.

    z_ref    : (Tc*B_pad, H)     time-major flattened chunk (row = t*B_pad + b), bf16
    wih_ref  : (H, 4H)           transposed W_ih, gate columns ordered [i, f, o, g], bf16
    whh_ref  : (H, 4H)           transposed W_hh, same gate order, bf16
    b_ref    : (1, 4H)           b_ih + b_hh, same gate order, f32
    wfc_ref  : (H, n_out)        transposed fc weight, zero-padded to 128-lane multiple, bf16
    bfc_ref  : (1, n_out)        fc bias, zero-padded, f32
    out_ref  : (Tc*B_pad, n_out) chunk output (lane-dense)
    hlast_ref: (B_pad, H)        final hidden state (revisited; last chunk wins)
    h_scr/c_scr: (B_pad, H) f32  LSTM state carried across chunks
    gx_scr   : (Tc*B_pad, 4H) f32 hoisted input-projection gates for the chunk
    """
    H = hidden_size
    B = batch_pad
    Tc = z_ref.shape[0] // B

    # Reset the carried LSTM state at the start of the sequence.
    @pl.when(pl.program_id(0) == 0)
    def _():
        h_scr[...] = jnp.zeros_like(h_scr)
        c_scr[...] = jnp.zeros_like(c_scr)

    # ---- Hoisted input projection: one MXU call per chunk, bias folded in. ----
    gx_scr[...] = (jnp.dot(z_ref[...], wih_ref[...],
                           preferred_element_type=jnp.float32)
                   + b_ref[...])

    whh = whh_ref[...]
    wfc = wfc_ref[...]
    bfc = bfc_ref[...]

    # ---- Sequential recurrence: h @ W_hh + gate math + interleaved FC. ----
    def step(t, carry):
        row = pl.multiple_of(t * B, 8)  # B is padded to a multiple of 8
        h_prev = h_scr[...].astype(whh.dtype)
        gates = (gx_scr[pl.ds(row, B), :]
                 + jnp.dot(h_prev, whh, preferred_element_type=jnp.float32))
        # Gate columns pre-ordered [i, f, o, g]: one sigmoid covers 3 gates.
        # NOTE: for H not a multiple of 128 these column slices cut inside a
        # lane vreg; pad H in the wrapper if this shows up hot for odd H.
        ifo = jax.nn.sigmoid(gates[:, :3 * H])
        g = jnp.tanh(gates[:, 3 * H:])
        i = ifo[:, :H]
        f = ifo[:, H:2 * H]
        o = ifo[:, 2 * H:]
        c = f * c_scr[...] + i * g
        h = o * jnp.tanh(c)
        c_scr[...] = c
        h_scr[...] = h
        # FC (+ optional sigmoid) interleaved into the recurrence: the small
        # matmul rides in MXU slack and the (B, n_out) store is lane-dense and
        # sublane-aligned, so there is no post-loop epilogue on the chunk path.
        y = (jnp.dot(h.astype(wfc.dtype), wfc, preferred_element_type=jnp.float32)
             + bfc)
        if use_act:
            y = jax.nn.sigmoid(y)
        out_ref[pl.ds(row, B), :] = y.astype(out_ref.dtype)
        return carry

    lax.fori_loop(0, Tc, step, 0, unroll=unroll)

    # Final hidden state: constant-index output block flushed once at grid end;
    # last grid step's write wins. Do not change its index_map / revisit mode.
    hlast_ref[...] = h_scr[...].astype(hlast_ref.dtype)


def decoder_forward(z, params, *, use_act, matmul_dtype=jnp.bfloat16):
    """z: (B, T, H) batch_first, like the PyTorch module. Returns (dec_out, hidden_state)."""
    B, T, H = z.shape
    input_size = params["w_fc"].shape[0]
    n_out = _round_up(max(input_size, 1), 128)   # lane-dense FC output width
    B_pad = _round_up(B, 8)                      # sublane-aligned batch

    def _reorder_gates(w):  # last dim is 4H in PyTorch order [i, f, g, o] -> [i, f, o, g]
        i, f, g, o = jnp.split(w, 4, axis=-1)
        return jnp.concatenate([i, f, o, g], axis=-1)

    wih_t = _reorder_gates(params["w_ih"].T).astype(matmul_dtype)              # (H, 4H)
    whh_t = _reorder_gates(params["w_hh"].T).astype(matmul_dtype)              # (H, 4H)
    b = _reorder_gates((params["b_ih"] + params["b_hh"]).reshape(1, 4 * H)
                       ).astype(jnp.float32)                                   # (1, 4H)
    wfc_t = jnp.zeros((H, n_out), matmul_dtype).at[:, :input_size].set(
        params["w_fc"].T.astype(matmul_dtype))                                 # (H, n_out)
    bfc = jnp.zeros((1, n_out), jnp.float32).at[:, :input_size].set(
        params["b_fc"].astype(jnp.float32))                                    # (1, n_out)

    # Time-major, batch padded, flattened to 2D so all in-kernel accesses are
    # aligned (sublane, lane) row slices.
    # TODO(synk): for very large B*T*H fold this transpose (and the output one)
    # into the producer/consumer -- they are extra HBM round trips outside the kernel.
    zp = z if B_pad == B else jnp.pad(z, ((0, B_pad - B), (0, 0), (0, 0)))
    z_flat = jnp.transpose(zp, (1, 0, 2)).reshape(T * B_pad, H).astype(matmul_dtype)

    vmem_cap = _vmem_capacity_bytes()
    budget = (vmem_cap * 3) // 4                         # ~48 MiB v7x, ~96 MiB v5e/v6e
    Tc = _pick_time_chunk(T, B_pad, H, n_out, budget)
    nT = T // Tc
    vmem_limit = int(min(vmem_cap * 7 // 8, 112 * _MIB))  # headroom for compiler scratch

    kernel = functools.partial(
        _decoder_kernel, hidden_size=H, batch_pad=B_pad, use_act=use_act,
        # TODO(synk): sweep this unroll factor (4/8/16) against the bundle dump
        # once H is large (vreg pressure vs MXU latency can flip the bottleneck).
        unroll=True if Tc <= 16 else 8)

    grid_spec = pltpu.PrefetchScalarGridSpec(
        num_scalar_prefetch=0,
        grid=(nT,),
        in_specs=[
            pl.BlockSpec((Tc * B_pad, H), lambda ti: (ti, 0)),      # z chunk
            _pinned_spec((H, 4 * H)),                               # W_ih^T (pinned)
            _pinned_spec((H, 4 * H)),                               # W_hh^T (pinned)
            _pinned_spec((1, 4 * H)),                               # bias   (pinned)
            _pinned_spec((H, n_out)),                               # W_fc^T (pinned, lane-padded)
            _pinned_spec((1, n_out)),                               # b_fc   (pinned)
        ],
        out_specs=(
            pl.BlockSpec((Tc * B_pad, n_out), lambda ti: (ti, 0)),  # decoder out (lane-dense)
            pl.BlockSpec((B_pad, H), lambda ti: (0, 0)),            # final hidden
        ),
        scratch_shapes=[
            pltpu.VMEM((B_pad, H), jnp.float32),            # h (carried across chunks)
            pltpu.VMEM((B_pad, H), jnp.float32),            # c (carried across chunks)
            pltpu.VMEM((Tc * B_pad, 4 * H), jnp.float32),   # hoisted x-gates for chunk
        ],
    )

    out_flat, h_last = pl.pallas_call(
        kernel,
        out_shape=(jax.ShapeDtypeStruct((T * B_pad, n_out), jnp.float32),
                   jax.ShapeDtypeStruct((B_pad, H), jnp.float32)),
        grid_spec=grid_spec,
        compiler_params=pltpu.CompilerParams(
            # The time axis carries the h/c recurrence -> must stay "arbitrary".
            # TODO(synk): add a leading "parallel" batch-block grid axis for v7x
            # megacore once B (or #independent sequences) is large enough.
            dimension_semantics=("arbitrary",),
            vmem_limit_bytes=vmem_limit),
    )(z_flat, wih_t, whh_t, b, wfc_t, bfc)

    dec_out = jnp.transpose(out_flat.reshape(T, B_pad, n_out), (1, 0, 2))
    dec_out = dec_out[:B, :, :input_size].astype(z.dtype)   # drop batch / lane padding
    hidden_state = h_last[:B].astype(z.dtype)[None]         # (1, B, H)
    return dec_out, hidden_state


def _reference(z, params, use_act, matmul_dtype=jnp.float32):
    """Pure-JAX reference matching PyTorch nn.LSTM + nn.Linear semantics.

    With matmul_dtype=bfloat16 it mirrors the kernel's mixed precision
    (bf16 matmul inputs, f32 accumulation and elementwise math).
    """
    B, T, H = z.shape
    md = matmul_dtype
    w_ih = params["w_ih"].T.astype(md)
    w_hh = params["w_hh"].T.astype(md)
    bias = (params["b_ih"] + params["b_hh"]).astype(jnp.float32)
    w_fc = params["w_fc"].T.astype(md)
    b_fc = params["b_fc"].astype(jnp.float32)
    zt = jnp.transpose(z, (1, 0, 2)).astype(md)

    def cell(carry, x):
        h, c = carry
        gates = (jnp.dot(x, w_ih, preferred_element_type=jnp.float32) + bias
                 + jnp.dot(h.astype(md), w_hh, preferred_element_type=jnp.float32))
        i, f, g, o = jnp.split(gates, 4, axis=-1)
        i, f, g, o = jax.nn.sigmoid(i), jax.nn.sigmoid(f), jnp.tanh(g), jax.nn.sigmoid(o)
        c = f * c + i * g
        h = o * jnp.tanh(c)
        return (h, c), h

    init = (jnp.zeros((B, H), jnp.float32), jnp.zeros((B, H), jnp.float32))
    (h_last, _), hs = lax.scan(cell, init, zt)
    hs = jnp.transpose(hs, (1, 0, 2))  # (B, T, H)
    y = jnp.dot(hs.astype(md), w_fc, preferred_element_type=jnp.float32) + b_fc
    if use_act:
        y = jax.nn.sigmoid(y)
    return y, h_last[None]


if __name__ == "__main__":
    # Module hyper-parameters (small, consistent with the forward pass):
    B, T = 2, 8                  # batch, seq_len
    hidden_size = 32
    input_size = 4
    use_act = True

    key = jax.random.PRNGKey(0)
    keys = jax.random.split(key, 7)
    bound = 1.0 / (hidden_size ** 0.5)

    def u(k, shape):
        return jax.random.uniform(k, shape, jnp.float32, -bound, bound)

    # Deterministic parameter init (PyTorch LSTM/Linear shapes).
    params = {
        "w_ih": u(keys[0], (4 * hidden_size, hidden_size)),
        "w_hh": u(keys[1], (4 * hidden_size, hidden_size)),
        "b_ih": u(keys[2], (4 * hidden_size,)),
        "b_hh": u(keys[3], (4 * hidden_size,)),
        "w_fc": u(keys[4], (input_size, hidden_size)),
        "b_fc": u(keys[5], (input_size,)),
    }
    z = jax.random.normal(keys[6], (B, T, hidden_size), jnp.float32)

    fwd = jax.jit(functools.partial(decoder_forward, use_act=use_act))
    dec_out, hidden_state = fwd(z, params)
    jax.block_until_ready((dec_out, hidden_state))

    assert dec_out.shape == (B, T, input_size)
    assert hidden_state.shape == (1, B, hidden_size)

    # Tight check against a precision-matched (bf16 matmul inputs) reference.
    ref_out_m, ref_hid_m = _reference(z, params, use_act, matmul_dtype=jnp.bfloat16)
    assert jnp.allclose(dec_out, ref_out_m, atol=2e-3, rtol=2e-3)
    assert jnp.allclose(hidden_state, ref_hid_m, atol=2e-3, rtol=2e-3)

    # Looser sanity check against the full-f32 reference (kernel uses bf16 matmul inputs).
    ref_out, ref_hidden = _reference(z, params, use_act, matmul_dtype=jnp.float32)
    assert jnp.allclose(dec_out, ref_out, atol=3e-2, rtol=3e-2)
    assert jnp.allclose(hidden_state, ref_hidden, atol=3e-2, rtol=3e-2)

    print("KERNEL_OK")
</pallas_src>

<mosaic_0001>
module attributes {stable_mosaic.version = 11 : i64} {
  func.func @_decoder_kernel(%arg0: i32, %arg1: memref<64x32xbf16, #tpu.memory_space<vmem>>, %arg2: memref<32x128xbf16, #tpu.memory_space<vmem>>, %arg3: memref<32x128xbf16, #tpu.memory_space<vmem>>, %arg4: memref<1x128xf32, #tpu.memory_space<vmem>>, %arg5: memref<32x128xbf16, #tpu.memory_space<vmem>>, %arg6: memref<1x128xf32, #tpu.memory_space<vmem>>, %arg7: memref<64x128xf32, #tpu.memory_space<vmem>>, %arg8: memref<8x32xf32, #tpu.memory_space<vmem>>, %arg9: memref<8x32xf32, #tpu.memory_space<vmem>>, %arg10: memref<8x32xf32, #tpu.memory_space<vmem>>, %arg11: memref<64x128xf32, #tpu.memory_space<vmem>>) attributes {dimension_semantics = [#tpu.dimension_semantics<arbitrary>], iteration_bounds = array<i64: 1>, scalar_prefetch = 0 : i64, scratch_operands = 3 : i64, tpu.core_type = #tpu.core_type<tc>, window_params = [{transform_indices = @transform_0, window_bounds = array<i64: 64, 32>}, {pipeline_mode = #tpu.pipeline_mode<synchronous>, transform_indices = @transform_1, window_bounds = array<i64: 32, 128>}, {pipeline_mode = #tpu.pipeline_mode<synchronous>, transform_indices = @transform_2, window_bounds = array<i64: 32, 128>}, {pipeline_mode = #tpu.pipeline_mode<synchronous>, transform_indices = @transform_3, window_bounds = array<i64: 1, 128>}, {pipeline_mode = #tpu.pipeline_mode<synchronous>, transform_indices = @transform_4, window_bounds = array<i64: 32, 128>}, {pipeline_mode = #tpu.pipeline_mode<synchronous>, transform_indices = @transform_5, window_bounds = array<i64: 1, 128>}, {transform_indices = @transform_6, window_bounds = array<i64: 64, 128>}, {pipeline_mode = #tpu.pipeline_mode<synchronous>, transform_indices = @transform_7, window_bounds = array<i64: 8, 32>}]} {
    %c0_i32 = arith.constant 0 : i32
    %0 = arith.cmpi eq, %arg0, %c0_i32 : i32
    %1 = arith.extui %0 : i1 to i32
    %c0_i32_0 = arith.constant 0 : i32
    %2 = arith.cmpi ne, %1, %c0_i32_0 : i32
    scf.if %2 {
      %cst_139 = arith.constant 0.000000e+00 : f32
      %319 = vector.broadcast %cst_139 : f32 to vector<8x32xf32>
      %c0_140 = arith.constant 0 : index
      %c0_141 = arith.constant 0 : index
      %320 = vector.load %arg9[%c0_140, %c0_141] : memref<8x32xf32, #tpu.memory_space<vmem>>, vector<8x32xf32>
      tpu.vector_store %arg9[%c0_140, %c0_141], %319 {strides = array<i32>} : memref<8x32xf32, #tpu.memory_space<vmem>>, vector<8x32xf32>,
      %cst_142 = arith.constant 0.000000e+00 : f32
      %321 = vector.broadcast %cst_142 : f32 to vector<8x32xf32>
      %c0_143 = arith.constant 0 : index
      %c0_144 = arith.constant 0 : index
      %322 = vector.load %arg10[%c0_143, %c0_144] : memref<8x32xf32, #tpu.memory_space<vmem>>, vector<8x32xf32>
      tpu.vector_store %arg10[%c0_143, %c0_144], %321 {strides = array<i32>} : memref<8x32xf32, #tpu.memory_space<vmem>>, vector<8x32xf32>,
    } else {
    }
    %c0 = arith.constant 0 : index
    %c0_1 = arith.constant 0 : index
    %3 = vector.load %arg1[%c0, %c0_1] : memref<64x32xbf16, #tpu.memory_space<vmem>>, vector<64x32xbf16>
    %c0_2 = arith.constant 0 : index
    %c0_3 = arith.constant 0 : index
    %4 = vector.load %arg2[%c0_2, %c0_3] : memref<32x128xbf16, #tpu.memory_space<vmem>>, vector<32x128xbf16>
    %cst = arith.constant dense<0.000000e+00> : vector<64x128xf32>
    %5 = tpu.matmul %3, %4, %cst {dimension_numbers = #tpu.dot_dimension_numbers<[1], [0], [0], [1], [0, 0, 1, 1], [], []>} : vector<64x32xbf16>, vector<32x128xbf16>, vector<64x128xf32> -> vector<64x128xf32>
    %c0_4 = arith.constant 0 : index
    %c0_5 = arith.constant 0 : index
    %6 = vector.load %arg4[%c0_4, %c0_5] : memref<1x128xf32, #tpu.memory_space<vmem>>, vector<1x128xf32>
    %7 = vector.broadcast %6 : vector<1x128xf32> to vector<64x128xf32>
    %8 = arith.addf %5, %7 : vector<64x128xf32>
    %c0_6 = arith.constant 0 : index
    %c0_7 = arith.constant 0 : index
    %9 = vector.load %arg11[%c0_6, %c0_7] : memref<64x128xf32, #tpu.memory_space<vmem>>, vector<64x128xf32>
    tpu.vector_store %arg11[%c0_6, %c0_7], %8 {strides = array<i32>} : memref<64x128xf32, #tpu.memory_space<vmem>>, vector<64x128xf32>,
    %c0_8 = arith.constant 0 : index
    %c0_9 = arith.constant 0 : index
    %10 = vector.load %arg3[%c0_8, %c0_9] : memref<32x128xbf16, #tpu.memory_space<vmem>>, vector<32x128xbf16>
    %c0_10 = arith.constant 0 : index
    %c0_11 = arith.constant 0 : index
    %11 = vector.load %arg5[%c0_10, %c0_11] : memref<32x128xbf16, #tpu.memory_space<vmem>>, vector<32x128xbf16>
    %c0_12 = arith.constant 0 : index
    %c0_13 = arith.constant 0 : index
    %12 = vector.load %arg6[%c0_12, %c0_13] : memref<1x128xf32, #tpu.memory_space<vmem>>, vector<1x128xf32>
    %c0_i32_14 = arith.constant 0 : i32
    %c8_i32 = arith.constant 8 : i32
    %13 = arith.muli %c0_i32_14, %c8_i32 : i32
    %14 = tpu.assume_multiple %13, 8 : i32
    %c0_15 = arith.constant 0 : index
    %c0_16 = arith.constant 0 : index
    %15 = vector.load %arg9[%c0_15, %c0_16] : memref<8x32xf32, #tpu.memory_space<vmem>>, vector<8x32xf32>
    %16 = arith.truncf %15 : vector<8x32xf32> to vector<8x32xbf16>
    %17 = arith.index_cast %14 : i32 to index
    %c0_17 = arith.constant 0 : index
    %18 = vector.load %arg11[%17, %c0_17] : memref<64x128xf32, #tpu.memory_space<vmem>>, vector<8x128xf32>
    %cst_18 = arith.constant dense<0.000000e+00> : vector<8x128xf32>
    %19 = tpu.matmul %16, %10, %cst_18 {dimension_numbers = #tpu.dot_dimension_numbers<[1], [0], [0], [1], [0, 0, 1, 1], [], []>} : vector<8x32xbf16>, vector<32x128xbf16>, vector<8x128xf32> -> vector<8x128xf32>
    %20 = arith.addf %18, %19 : vector<8x128xf32>
    %21 = vector.extract_strided_slice %20 {offsets = [0, 0], sizes = [8, 96], strides = [1, 1]} : vector<8x128xf32> to vector<8x96xf32>
    %22 = arith.negf %21 : vector<8x96xf32>
    %23 = math.exp %22 : vector<8x96xf32>
    %cst_19 = arith.constant 1.000000e+00 : f32
    %24 = vector.broadcast %cst_19 : f32 to vector<8x96xf32>
    %25 = arith.addf %24, %23 : vector<8x96xf32>
    %26 = arith.divf %24, %25 : vector<8x96xf32>
    %27 = vector.extract_strided_slice %20 {offsets = [0, 96], sizes = [8, 32], strides = [1, 1]} : vector<8x128xf32> to vector<8x32xf32>
    %28 = math.tanh %27 : vector<8x32xf32>
    %29 = vector.extract_strided_slice %26 {offsets = [0, 0], sizes = [8, 32], strides = [1, 1]} : vector<8x96xf32> to vector<8x32xf32>
    %30 = vector.extract_strided_slice %26 {offsets = [0, 32], sizes = [8, 32], strides = [1, 1]} : vector<8x96xf32> to vector<8x32xf32>
    %31 = vector.extract_strided_slice %26 {offsets = [0, 64], sizes = [8, 32], strides = [1, 1]} : vector<8x96xf32> to vector<8x32xf32>
    %c0_20 = arith.constant 0 : index
    %c0_21 = arith.constant 0 : index
    %32 = vector.load %arg10[%c0_20, %c0_21] : memref<8x32xf32, #tpu.memory_space<vmem>>, vector<8x32xf32>
    %33 = arith.mulf %30, %32 : vector<8x32xf32>
    %34 = arith.mulf %29, %28 : vector<8x32xf32>
    %35 = arith.addf %33, %34 : vector<8x32xf32>
    %36 = math.tanh %35 : vector<8x32xf32>
    %37 = arith.mulf %31, %36 : vector<8x32xf32>
    %c0_22 = arith.constant 0 : index
    %c0_23 = arith.constant 0 : index
    %38 = vector.load %arg10[%c0_22, %c0_23] : memref<8x32xf32, #tpu.memory_space<vmem>>, vector<8x32xf32>
    tpu.vector_store %arg10[%c0_22, %c0_23], %35 {strides = array<i32>} : memref<8x32xf32, #tpu.memory_space<vmem>>, vector<8x32xf32>,
    %c0_24 = arith.constant 0 : index
    %c0_25 = arith.constant 0 : index
    %39 = vector.load %arg9[%c0_24, %c0_25] : memref<8x32xf32, #tpu.memory_space<vmem>>, vector<8x32xf32>
    tpu.vector_store %arg9[%c0_24, %c0_25], %37 {strides = array<i32>} : memref<8x32xf32, #tpu.memory_space<vmem>>, vector<8x32xf32>,
    %40 = arith.truncf %37 : vector<8x32xf32> to vector<8x32xbf16>
    %cst_26 = arith.constant dense<0.000000e+00> : vector<8x128xf32>
    %41 = tpu.matmul %40, %11, %cst_26 {dimension_numbers = #tpu.dot_dimension_numbers<[1], [0], [0], [1], [0, 0, 1, 1], [], []>} : vector<8x32xbf16>, vector<32x128xbf16>, vector<8x128xf32> -> vector<8x128xf32>
    %42 = vector.broadcast %12 : vector<1x128xf32> to vector<8x128xf32>
    %43 = arith.addf %41, %42 : vector<8x128xf32>
    %44 = arith.negf %43 : vector<8x128xf32>
    %45 = math.exp %44 : vector<8x128xf32>
    %cst_27 = arith.constant 1.000000e+00 : f32
    %46 = vector.broadcast %cst_27 : f32 to vector<8x128xf32>
    %47 = arith.addf %46, %45 : vector<8x128xf32>
    %48 = arith.divf %46, %47 : vector<8x128xf32>
    %49 = arith.index_cast %14 : i32 to index
    %c0_28 = arith.constant 0 : index
    %50 = vector.load %arg7[%49, %c0_28] : memref<64x128xf32, #tpu.memory_space<vmem>>, vector<8x128xf32>
    tpu.vector_store %arg7[%49, %c0_28], %48 {strides = array<i32>} : memref<64x128xf32, #tpu.memory_space<vmem>>, vector<8x128xf32>,
    %c1_i32 = arith.constant 1 : i32
    %c8_i32_29 = arith.constant 8 : i32
    %51 = arith.muli %c1_i32, %c8_i32_29 : i32
    %52 = tpu.assume_multiple %51, 8 : i32
    %c0_30 = arith.constant 0 : index
    %c0_31 = arith.constant 0 : index
    %53 = vector.load %arg9[%c0_30, %c0_31] : memref<8x32xf32, #tpu.memory_space<vmem>>, vector<8x32xf32>
    %54 = arith.truncf %53 : vector<8x32xf32> to vector<8x32xbf16>
    %55 = arith.index_cast %52 : i32 to index
    %c0_32 = arith.constant 0 : index
    %56 = vector.load %arg11[%55, %c0_32] : memref<64x128xf32, #tpu.memory_space<vmem>>, vector<8x128xf32>
    %cst_33 = arith.constant dense<0.000000e+00> : vector<8x128xf32>
    %57 = tpu.matmul %54, %10, %cst_33 {dimension_numbers = #tpu.dot_dimension_numbers<[1], [0], [0], [1], [0, 0, 1, 1], [], []>} : vector<8x32xbf16>, vector<32x128xbf16>, vector<8x128xf32> -> vector<8x128xf32>
    %58 = arith.addf %56, %57 : vector<8x128xf32>
    %59 = vector.extract_strided_slice %58 {offsets = [0, 0], sizes = [8, 96], strides = [1, 1]} : vector<8x128xf32> to vector<8x96xf32>
    %60 = arith.negf %59 : vector<8x96xf32>
    %61 = math.exp %60 : vector<8x96xf32>
    %cst_34 = arith.constant 1.000000e+00 : f32
    %62 = vector.broadcast %cst_34 : f32 to vector<8x96xf32>
    %63 = arith.addf %62, %61 : vector<8x96xf32>
    %64 = arith.divf %62, %63 : vector<8x96xf32>
    %65 = vector.extract_strided_slice %58 {offsets = [0, 96], sizes = [8, 32], strides = [1, 1]} : vector<8x128xf32> to vector<8x32xf32>
    %66 = math.tanh %65 : vector<8x32xf32>
    %67 = vector.extract_strided_slice %64 {offsets = [0, 0], sizes = [8, 32], strides = [1, 1]} : vector<8x96xf32> to vector<8x32xf32>
    %68 = vector.extract_strided_slice %64 {offsets = [0, 32], sizes = [8, 32], strides = [1, 1]} : vector<8x96xf32> to vector<8x32xf32>
    %69 = vector.extract_strided_slice %64 {offsets = [0, 64], sizes = [8, 32], strides = [1, 1]} : vector<8x96xf32> to vector<8x32xf32>
    %c0_35 = arith.constant 0 : index
    %c0_36 = arith.constant 0 : index
    %70 = vector.load %arg10[%c0_35, %c0_36] : memref<8x32xf32, #tpu.memory_space<vmem>>, vector<8x32xf32>
    %71 = arith.mulf %68, %70 : vector<8x32xf32>
    %72 = arith.mulf %67, %66 : vector<8x32xf32>
    %73 = arith.addf %71, %72 : vector<8x32xf32>
    %74 = math.tanh %73 : vector<8x32xf32>
    %75 = arith.mulf %69, %74 : vector<8x32xf32>
    %c0_37 = arith.constant 0 : index
    %c0_38 = arith.constant 0 : index
    %76 = vector.load %arg10[%c0_37, %c0_38] : memref<8x32xf32, #tpu.memory_space<vmem>>, vector<8x32xf32>
    tpu.vector_store %arg10[%c0_37, %c0_38], %73 {strides = array<i32>} : memref<8x32xf32, #tpu.memory_space<vmem>>, vector<8x32xf32>,
    %c0_39 = arith.constant 0 : index
    %c0_40 = arith.constant 0 : index
    %77 = vector.load %arg9[%c0_39, %c0_40] : memref<8x32xf32, #tpu.memory_space<vmem>>, vector<8x32xf32>
    tpu.vector_store %arg9[%c0_39, %c0_40], %75 {strides = array<i32>} : memref<8x32xf32, #tpu.memory_space<vmem>>, vector<8x32xf32>,
    %78 = arith.truncf %75 : vector<8x32xf32> to vector<8x32xbf16>
    %cst_41 = arith.constant dense<0.000000e+00> : vector<8x128xf32>
    %79 = tpu.matmul %78, %11, %cst_41 {dimension_numbers = #tpu.dot_dimension_numbers<[1], [0], [0], [1], [0, 0, 1, 1], [], []>} : vector<8x32xbf16>, vector<32x128xbf16>, vector<8x128xf32> -> vector<8x128xf32>
    %80 = vector.broadcast %12 : vector<1x128xf32> to vector<8x128xf32>
    %81 = arith.addf %79, %80 : vector<8x128xf32>
    %82 = arith.negf %81 : vector<8x128xf32>
    %83 = math.exp %82 : vector<8x128xf32>
    %cst_42 = arith.constant 1.000000e+00 : f32
    %84 = vector.broadcast %cst_42 : f32 to vector<8x128xf32>
    %85 = arith.addf %84, %83 : vector<8x128xf32>
    %86 = arith.divf %84, %85 : vector<8x128xf32>
    %87 = arith.index_cast %52 : i32 to index
    %c0_43 = arith.constant 0 : index
    %88 = vector.load %arg7[%87, %c0_43] : memref<64x128xf32, #tpu.memory_space<vmem>>, vector<8x128xf32>
    tpu.vector_store %arg7[%87, %c0_43], %86 {strides = array<i32>} : memref<64x128xf32, #tpu.memory_space<vmem>>, vector<8x128xf32>,
    %c2_i32 = arith.constant 2 : i32
    %c8_i32_44 = arith.constant 8 : i32
    %89 = arith.muli %c2_i32, %c8_i32_44 : i32
    %90 = tpu.assume_multiple %89, 8 : i32
    %c0_45 = arith.constant 0 : index
    %c0_46 = arith.constant 0 : index
    %91 = vector.load %arg9[%c0_45, %c0_46] : memref<8x32xf32, #tpu.memory_space<vmem>>, vector<8x32xf32>
    %92 = arith.truncf %91 : vector<8x32xf32> to vector<8x32xbf16>
    %93 = arith.index_cast %90 : i32 to index
    %c0_47 = arith.constant 0 : index
    %94 = vector.load %arg11[%93, %c0_47] : memref<64x128xf32, #tpu.memory_space<vmem>>, vector<8x128xf32>
    %cst_48 = arith.constant dense<0.000000e+00> : vector<8x128xf32>
    %95 = tpu.matmul %92, %10, %cst_48 {dimension_numbers = #tpu.dot_dimension_numbers<[1], [0], [0], [1], [0, 0, 1, 1], [], []>} : vector<8x32xbf16>, vector<32x128xbf16>, vector<8x128xf32> -> vector<8x128xf32>
    %96 = arith.addf %94, %95 : vector<8x128xf32>
    %97 = vector.extract_strided_slice %96 {offsets = [0, 0], sizes = [8, 96], strides = [1, 1]} : vector<8x128xf32> to vector<8x96xf32>
    %98 = arith.negf %97 : vector<8x96xf32>
    %99 = math.exp %98 : vector<8x96xf32>
    %cst_49 = arith.constant 1.000000e+00 : f32
    %100 = vector.broadcast %cst_49 : f32 to vector<8x96xf32>
    %101 = arith.addf %100, %99 : vector<8x96xf32>
    %102 = arith.divf %100, %101 : vector<8x96xf32>
    %103 = vector.extract_strided_slice %96 {offsets = [0, 96], sizes = [8, 32], strides = [1, 1]} : vector<8x128xf32> to vector<8x32xf32>
    %104 = math.tanh %103 : vector<8x32xf32>
    %105 = vector.extract_strided_slice %102 {offsets = [0, 0], sizes = [8, 32], strides = [1, 1]} : vector<8x96xf32> to vector<8x32xf32>
    %106 = vector.extract_strided_slice %102 {offsets = [0, 32], sizes = [8, 32], strides = [1, 1]} : vector<8x96xf32> to vector<8x32xf32>
    %107 = vector.extract_strided_slice %102 {offsets = [0, 64], sizes = [8, 32], strides = [1, 1]} : vector<8x96xf32> to vector<8x32xf32>
    %c0_50 = arith.constant 0 : index
    %c0_51 = arith.constant 0 : index
    %108 = vector.load %arg10[%c0_50, %c0_51] : memref<8x32xf32, #tpu.memory_space<vmem>>, vector<8x32xf32>
    %109 = arith.mulf %106, %108 : vector<8x32xf32>
    %110 = arith.mulf %105, %104 : vector<8x32xf32>
    %111 = arith.addf %109, %110 : vector<8x32xf32>
    %112 = math.tanh %111 : vector<8x32xf32>
    %113 = arith.mulf %107, %112 : vector<8x32xf32>
    %c0_52 = arith.constant 0 : index
    %c0_53 = arith.constant 0 : index
    %114 = vector.load %arg10[%c0_52, %c0_53] : memref<8x32xf32, #tpu.memory_space<vmem>>, vector<8x32xf32>
    tpu.vector_store %arg10[%c0_52, %c0_53], %111 {strides = array<i32>} : memref<8x32xf32, #tpu.memory_space<vmem>>, vector<8x32xf32>,
    %c0_54 = arith.constant 0 : index
    %c0_55 = arith.constant 0 : index
    %115 = vector.load %arg9[%c0_54, %c0_55] : memref<8x32xf32, #tpu.memory_space<vmem>>, vector<8x32xf32>
    tpu.vector_store %arg9[%c0_54, %c0_55], %113 {strides = array<i32>} : memref<8x32xf32, #tpu.memory_space<vmem>>, vector<8x32xf32>,
    %116 = arith.truncf %113 : vector<8x32xf32> to vector<8x32xbf16>
    %cst_56 = arith.constant dense<0.000000e+00> : vector<8x128xf32>
    %117 = tpu.matmul %116, %11, %cst_56 {dimension_numbers = #tpu.dot_dimension_numbers<[1], [0], [0], [1], [0, 0, 1, 1], [], []>} : vector<8x32xbf16>, vector<32x128xbf16>, vector<8x128xf32> -> vector<8x128xf32>
    %118 = vector.broadcast %12 : vector<1x128xf32> to vector<8x128xf32>
    %119 = arith.addf %117, %118 : vector<8x128xf32>
    %120 = arith.negf %119 : vector<8x128xf32>
    %121 = math.exp %120 : vector<8x128xf32>
    %cst_57 = arith.constant 1.000000e+00 : f32
    %122 = vector.broadcast %cst_57 : f32 to vector<8x128xf32>
    %123 = arith.addf %122, %121 : vector<8x128xf32>
    %124 = arith.divf %122, %123 : vector<8x128xf32>
    %125 = arith.index_cast %90 : i32 to index
    %c0_58 = arith.constant 0 : index
    %126 = vector.load %arg7[%125, %c0_58] : memref<64x128xf32, #tpu.memory_space<vmem>>, vector<8x128xf32>
    tpu.vector_store %arg7[%125, %c0_58], %124 {strides = array<i32>} : memref<64x128xf32, #tpu.memory_space<vmem>>, vector<8x128xf32>,
    %c3_i32 = arith.constant 3 : i32
    %c8_i32_59 = arith.constant 8 : i32
    %127 = arith.muli %c3_i32, %c8_i32_59 : i32
    %128 = tpu.assume_multiple %127, 8 : i32
    %c0_60 = arith.constant 0 : index
    %c0_61 = arith.constant 0 : index
    %129 = vector.load %arg9[%c0_60, %c0_61] : memref<8x32xf32, #tpu.memory_space<vmem>>, vector<8x32xf32>
    %130 = arith.truncf %129 : vector<8x32xf32> to vector<8x32xbf16>
    %131 = arith.index_cast %128 : i32 to index
    %c0_62 = arith.constant 0 : index
    %132 = vector.load %arg11[%131, %c0_62] : memref<64x128xf32, #tpu.memory_space<vmem>>, vector<8x128xf32>
    %cst_63 = arith.constant dense<0.000000e+00> : vector<8x128xf32>
    %133 = tpu.matmul %130, %10, %cst_63 {dimension_numbers = #tpu.dot_dimension_numbers<[1], [0], [0], [1], [0, 0, 1, 1], [], []>} : vector<8x32xbf16>, vector<32x128xbf16>, vector<8x128xf32> -> vector<8x128xf32>
    %134 = arith.addf %132, %133 : vector<8x128xf32>
    %135 = vector.extract_strided_slice %134 {offsets = [0, 0], sizes = [8, 96], strides = [1, 1]} : vector<8x128xf32> to vector<8x96xf32>
    %136 = arith.negf %135 : vector<8x96xf32>
    %137 = math.exp %136 : vector<8x96xf32>
    %cst_64 = arith.constant 1.000000e+00 : f32
    %138 = vector.broadcast %cst_64 : f32 to vector<8x96xf32>
    %139 = arith.addf %138, %137 : vector<8x96xf32>
    %140 = arith.divf %138, %139 : vector<8x96xf32>
    %141 = vector.extract_strided_slice %134 {offsets = [0, 96], sizes = [8, 32], strides = [1, 1]} : vector<8x128xf32> to vector<8x32xf32>
    %142 = math.tanh %141 : vector<8x32xf32>
    %143 = vector.extract_strided_slice %140 {offsets = [0, 0], sizes = [8, 32], strides = [1, 1]} : vector<8x96xf32> to vector<8x32xf32>
    %144 = vector.extract_strided_slice %140 {offsets = [0, 32], sizes = [8, 32], strides = [1, 1]} : vector<8x96xf32> to vector<8x32xf32>
    %145 = vector.extract_strided_slice %140 {offsets = [0, 64], sizes = [8, 32], strides = [1, 1]} : vector<8x96xf32> to vector<8x32xf32>
    %c0_65 = arith.constant 0 : index
    %c0_66 = arith.constant 0 : index
    %146 = vector.load %arg10[%c0_65, %c0_66] : memref<8x32xf32, #tpu.memory_space<vmem>>, vector<8x32xf32>
    %147 = arith.mulf %144, %146 : vector<8x32xf32>
    %148 = arith.mulf %143, %142 : vector<8x32xf32>
    %149 = arith.addf %147, %148 : vector<8x32xf32>
    %150 = math.tanh %149 : vector<8x32xf32>
    %151 = arith.mulf %145, %150 : vector<8x32xf32>
    %c0_67 = arith.constant 0 : index
    %c0_68 = arith.constant 0 : index
    %152 = vector.load %arg10[%c0_67, %c0_68] : memref<8x32xf32, #tpu.memory_space<vmem>>, vector<8x32xf32>
    tpu.vector_store %arg10[%c0_67, %c0_68], %149 {strides = array<i32>} : memref<8x32xf32, #tpu.memory_space<vmem>>, vector<8x32xf32>,
    %c0_69 = arith.constant 0 : index
    %c0_70 = arith.constant 0 : index
    %153 = vector.load %arg9[%c0_69, %c0_70] : memref<8x32xf32, #tpu.memory_space<vmem>>, vector<8x32xf32>
    tpu.vector_store %arg9[%c0_69, %c0_70], %151 {strides = array<i32>} : memref<8x32xf32, #tpu.memory_space<vmem>>, vector<8x32xf32>,
    %154 = arith.truncf %151 : vector<8x32xf32> to vector<8x32xbf16>
    %cst_71 = arith.constant dense<0.000000e+00> : vector<8x128xf32>
    %155 = tpu.matmul %154, %11, %cst_71 {dimension_numbers = #tpu.dot_dimension_numbers<[1], [0], [0], [1], [0, 0, 1, 1], [], []>} : vector<8x32xbf16>, vector<32x128xbf16>, vector<8x128xf32> -> vector<8x128xf32>
    %156 = vector.broadcast %12 : vector<1x128xf32> to vector<8x128xf32>
    %157 = arith.addf %155, %156 : vector<8x128xf32>
    %158 = arith.negf %157 : vector<8x128xf32>
    %159 = math.exp %158 : vector<8x128xf32>
    %cst_72 = arith.constant 1.000000e+00 : f32
    %160 = vector.broadcast %cst_72 : f32 to vector<8x128xf32>
    %161 = arith.addf %160, %159 : vector<8x128xf32>
    %162 = arith.divf %160, %161 : vector<8x128xf32>
    %163 = arith.index_cast %128 : i32 to index
    %c0_73 = arith.constant 0 : index
    %164 = vector.load %arg7[%163, %c0_73] : memref<64x128xf32, #tpu.memory_space<vmem>>, vector<8x128xf32>
    tpu.vector_store %arg7[%163, %c0_73], %162 {strides = array<i32>} : memref<64x128xf32, #tpu.memory_space<vmem>>, vector<8x128xf32>,
    %c4_i32 = arith.constant 4 : i32
    %c8_i32_74 = arith.constant 8 : i32
    %165 = arith.muli %c4_i32, %c8_i32_74 : i32
    %166 = tpu.assume_multiple %165, 8 : i32
    %c0_75 = arith.constant 0 : index
    %c0_76 = arith.constant 0 : index
    %167 = vector.load %arg9[%c0_75, %c0_76] : memref<8x32xf32, #tpu.memory_space<vmem>>, vector<8x32xf32>
    %168 = arith.truncf %167 : vector<8x32xf32> to vector<8x32xbf16>
    %169 = arith.index_cast %166 : i32 to index
    %c0_77 = arith.constant 0 : index
    %170 = vector.load %arg11[%169, %c0_77] : memref<64x128xf32, #tpu.memory_space<vmem>>, vector<8x128xf32>
    %cst_78 = arith.constant dense<0.000000e+00> : vector<8x128xf32>
    %171 = tpu.matmul %168, %10, %cst_78 {dimension_numbers = #tpu.dot_dimension_numbers<[1], [0], [0], [1], [0, 0, 1, 1], [], []>} : vector<8x32xbf16>, vector<32x128xbf16>, vector<8x128xf32> -> vector<8x128xf32>
    %172 = arith.addf %170, %171 : vector<8x128xf32>
    %173 = vector.extract_strided_slice %172 {offsets = [0, 0], sizes = [8, 96], strides = [1, 1]} : vector<8x128xf32> to vector<8x96xf32>
    %174 = arith.negf %173 : vector<8x96xf32>
    %175 = math.exp %174 : vector<8x96xf32>
    %cst_79 = arith.constant 1.000000e+00 : f32
    %176 = vector.broadcast %cst_79 : f32 to vector<8x96xf32>
    %177 = arith.addf %176, %175 : vector<8x96xf32>
    %178 = arith.divf %176, %177 : vector<8x96xf32>
    %179 = vector.extract_strided_slice %172 {offsets = [0, 96], sizes = [8, 32], strides = [1, 1]} : vector<8x128xf32> to vector<8x32xf32>
    %180 = math.tanh %179 : vector<8x32xf32>
    %181 = vector.extract_strided_slice %178 {offsets = [0, 0], sizes = [8, 32], strides = [1, 1]} : vector<8x96xf32> to vector<8x32xf32>
    %182 = vector.extract_strided_slice %178 {offsets = [0, 32], sizes = [8, 32], strides = [1, 1]} : vector<8x96xf32> to vector<8x32xf32>
    %183 = vector.extract_strided_slice %178 {offsets = [0, 64], sizes = [8, 32], strides = [1, 1]} : vector<8x96xf32> to vector<8x32xf32>
    %c0_80 = arith.constant 0 : index
    %c0_81 = arith.constant 0 : index
    %184 = vector.load %arg10[%c0_80, %c0_81] : memref<8x32xf32, #tpu.memory_space<vmem>>, vector<8x32xf32>
    %185 = arith.mulf %182, %184 : vector<8x32xf32>
    %186 = arith.mulf %181, %180 : vector<8x32xf32>
    %187 = arith.addf %185, %186 : vector<8x32xf32>
    %188 = math.tanh %187 : vector<8x32xf32>
    %189 = arith.mulf %183, %188 : vector<8x32xf32>
    %c0_82 = arith.constant 0 : index
    %c0_83 = arith.constant 0 : index
    %190 = vector.load %arg10[%c0_82, %c0_83] : memref<8x32xf32, #tpu.memory_space<vmem>>, vector<8x32xf32>
    tpu.vector_store %arg10[%c0_82, %c0_83], %187 {strides = array<i32>} : memref<8x32xf32, #tpu.memory_space<vmem>>, vector<8x32xf32>,
    %c0_84 = arith.constant 0 : index
    %c0_85 = arith.constant 0 : index
    %191 = vector.load %arg9[%c0_84, %c0_85] : memref<8x32xf32, #tpu.memory_space<vmem>>, vector<8x32xf32>
    tpu.vector_store %arg9[%c0_84, %c0_85], %189 {strides = array<i32>} : memref<8x32xf32, #tpu.memory_space<vmem>>, vector<8x32xf32>,
    %192 = arith.truncf %189 : vector<8x32xf32> to vector<8x32xbf16>
    %cst_86 = arith.constant dense<0.000000e+00> : vector<8x128xf32>
    %193 = tpu.matmul %192, %11, %cst_86 {dimension_numbers = #tpu.dot_dimension_numbers<[1], [0], [0], [1], [0, 0, 1, 1], [], []>} : vector<8x32xbf16>, vector<32x128xbf16>, vector<8x128xf32> -> vector<8x128xf32>
    %194 = vector.broadcast %12 : vector<1x128xf32> to vector<8x128xf32>
    %195 = arith.addf %193, %194 : vector<8x128xf32>
    %196 = arith.negf %195 : vector<8x128xf32>
    %197 = math.exp %196 : vector<8x128xf32>
    %cst_87 = arith.constant 1.000000e+00 : f32
    %198 = vector.broadcast %cst_87 : f32 to vector<8x128xf32>
    %199 = arith.addf %198, %197 : vector<8x128xf32>
    %200 = arith.divf %198, %199 : vector<8x128xf32>
    %201 = arith.index_cast %166 : i32 to index
    %c0_88 = arith.constant 0 : index
    %202 = vector.load %arg7[%201, %c0_88] : memref<64x128xf32, #tpu.memory_space<vmem>>, vector<8x128xf32>
    tpu.vector_store %arg7[%201, %c0_88], %200 {strides = array<i32>} : memref<64x128xf32, #tpu.memory_space<vmem>>, vector<8x128xf32>,
    %c5_i32 = arith.constant 5 : i32
    %c8_i32_89 = arith.constant 8 : i32
    %203 = arith.muli %c5_i32, %c8_i32_89 : i32
    %204 = tpu.assume_multiple %203, 8 : i32
    %c0_90 = arith.constant 0 : index
    %c0_91 = arith.constant 0 : index
    %205 = vector.load %arg9[%c0_90, %c0_91] : memref<8x32xf32, #tpu.memory_space<vmem>>, vector<8x32xf32>
    %206 = arith.truncf %205 : vector<8x32xf32> to vector<8x32xbf16>
    %207 = arith.index_cast %204 : i32 to index
    %c0_92 = arith.constant 0 : index
    %208 = vector.load %arg11[%207, %c0_92] : memref<64x128xf32, #tpu.memory_space<vmem>>, vector<8x128xf32>
    %cst_93 = arith.constant dense<0.000000e+00> : vector<8x128xf32>
    %209 = tpu.matmul %206, %10, %cst_93 {dimension_numbers = #tpu.dot_dimension_numbers<[1], [0], [0], [1], [0, 0, 1, 1], [], []>} : vector<8x32xbf16>, vector<32x128xbf16>, vector<8x128xf32> -> vector<8x128xf32>
    %210 = arith.addf %208, %209 : vector<8x128xf32>
    %211 = vector.extract_strided_slice %210 {offsets = [0, 0], sizes = [8, 96], strides = [1, 1]} : vector<8x128xf32> to vector<8x96xf32>
    %212 = arith.negf %211 : vector<8x96xf32>
    %213 = math.exp %212 : vector<8x96xf32>
    %cst_94 = arith.constant 1.000000e+00 : f32
    %214 = vector.broadcast %cst_94 : f32 to vector<8x96xf32>
    %215 = arith.addf %214, %213 : vector<8x96xf32>
    %216 = arith.divf %214, %215 : vector<8x96xf32>
    %217 = vector.extract_strided_slice %210 {offsets = [0, 96], sizes = [8, 32], strides = [1, 1]} : vector<8x128xf32> to vector<8x32xf32>
    %218 = math.tanh %217 : vector<8x32xf32>
    %219 = vector.extract_strided_slice %216 {offsets = [0, 0], sizes = [8, 32], strides = [1, 1]} : vector<8x96xf32> to vector<8x32xf32>
    %220 = vector.extract_strided_slice %216 {offsets = [0, 32], sizes = [8, 32], strides = [1, 1]} : vector<8x96xf32> to vector<8x32xf32>
    %221 = vector.extract_strided_slice %216 {offsets = [0, 64], sizes = [8, 32], strides = [1, 1]} : vector<8x96xf32> to vector<8x32xf32>
    %c0_95 = arith.constant 0 : index
    %c0_96 = arith.constant 0 : index
    %222 = vector.load %arg10[%c0_95, %c0_96] : memref<8x32xf32, #tpu.memory_space<vmem>>, vector<8x32xf32>
    %223 = arith.mulf %220, %222 : vector<8x32xf32>
    %224 = arith.mulf %219, %218 : vector<8x32xf32>
    %225 = arith.addf %223, %224 : vector<8x32xf32>
    %226 = math.tanh %225 : vector<8x32xf32>
    %227 = arith.mulf %221, %226 : vector<8x32xf32>
    %c0_97 = arith.constant 0 : index
    %c0_98 = arith.constant 0 : index
    %228 = vector.load %arg10[%c0_97, %c0_98] : memref<8x32xf32, #tpu.memory_space<vmem>>, vector<8x32xf32>
    tpu.vector_store %arg10[%c0_97, %c0_98], %225 {strides = array<i32>} : memref<8x32xf32, #tpu.memory_space<vmem>>, vector<8x32xf32>,
    %c0_99 = arith.constant 0 : index
    %c0_100 = arith.constant 0 : index
    %229 = vector.load %arg9[%c0_99, %c0_100] : memref<8x32xf32, #tpu.memory_space<vmem>>, vector<8x32xf32>
    tpu.vector_store %arg9[%c0_99, %c0_100], %227 {strides = array<i32>} : memref<8x32xf32, #tpu.memory_space<vmem>>, vector<8x32xf32>,
    %230 = arith.truncf %227 : vector<8x32xf32> to vector<8x32xbf16>
    %cst_101 = arith.constant dense<0.000000e+00> : vector<8x128xf32>
    %231 = tpu.matmul %230, %11, %cst_101 {dimension_numbers = #tpu.dot_dimension_numbers<[1], [0], [0], [1], [0, 0, 1, 1], [], []>} : vector<8x32xbf16>, vector<32x128xbf16>, vector<8x128xf32> -> vector<8x128xf32>
    %232 = vector.broadcast %12 : vector<1x128xf32> to vector<8x128xf32>
    %233 = arith.addf %231, %232 : vector<8x128xf32>
    %234 = arith.negf %233 : vector<8x128xf32>
    %235 = math.exp %234 : vector<8x128xf32>
    %cst_102 = arith.constant 1.000000e+00 : f32
    %236 = vector.broadcast %cst_102 : f32 to vector<8x128xf32>
    %237 = arith.addf %236, %235 : vector<8x128xf32>
    %238 = arith.divf %236, %237 : vector<8x128xf32>
    %239 = arith.index_cast %204 : i32 to index
    %c0_103 = arith.constant 0 : index
    %240 = vector.load %arg7[%239, %c0_103] : memref<64x128xf32, #tpu.memory_space<vmem>>, vector<8x128xf32>
    tpu.vector_store %arg7[%239, %c0_103], %238 {strides = array<i32>} : memref<64x128xf32, #tpu.memory_space<vmem>>, vector<8x128xf32>,
    %c6_i32 = arith.constant 6 : i32
    %c8_i32_104 = arith.constant 8 : i32
    %241 = arith.muli %c6_i32, %c8_i32_104 : i32
    %242 = tpu.assume_multiple %241, 8 : i32
    %c0_105 = arith.constant 0 : index
    %c0_106 = arith.constant 0 : index
    %243 = vector.load %arg9[%c0_105, %c0_106] : memref<8x32xf32, #tpu.memory_space<vmem>>, vector<8x32xf32>
    %244 = arith.truncf %243 : vector<8x32xf32> to vector<8x32xbf16>
    %245 = arith.index_cast %242 : i32 to index
    %c0_107 = arith.constant 0 : index
    %246 = vector.load %arg11[%245, %c0_107] : memref<64x128xf32, #tpu.memory_space<vmem>>, vector<8x128xf32>
    %cst_108 = arith.constant dense<0.000000e+00> : vector<8x128xf32>
    %247 = tpu.matmul %244, %10, %cst_108 {dimension_numbers = #tpu.dot_dimension_numbers<[1], [0], [0], [1], [0, 0, 1, 1], [], []>} : vector<8x32xbf16>, vector<32x128xbf16>, vector<8x128xf32> -> vector<8x128xf32>
    %248 = arith.addf %246, %247 : vector<8x128xf32>
    %249 = vector.extract_strided_slice %248 {offsets = [0, 0], sizes = [8, 96], strides = [1, 1]} : vector<8x128xf32> to vector<8x96xf32>
    %250 = arith.negf %249 : vector<8x96xf32>
    %251 = math.exp %250 : vector<8x96xf32>
    %cst_109 = arith.constant 1.000000e+00 : f32
    %252 = vector.broadcast %cst_109 : f32 to vector<8x96xf32>
    %253 = arith.addf %252, %251 : vector<8x96xf32>
    %254 = arith.divf %252, %253 : vector<8x96xf32>
    %255 = vector.extract_strided_slice %248 {offsets = [0, 96], sizes = [8, 32], strides = [1, 1]} : vector<8x128xf32> to vector<8x32xf32>
    %256 = math.tanh %255 : vector<8x32xf32>
    %257 = vector.extract_strided_slice %254 {offsets = [0, 0], sizes = [8, 32], strides = [1, 1]} : vector<8x96xf32> to vector<8x32xf32>
    %258 = vector.extract_strided_slice %254 {offsets = [0, 32], sizes = [8, 32], strides = [1, 1]} : vector<8x96xf32> to vector<8x32xf32>
    %259 = vector.extract_strided_slice %254 {offsets = [0, 64], sizes = [8, 32], strides = [1, 1]} : vector<8x96xf32> to vector<8x32xf32>
    %c0_110 = arith.constant 0 : index
    %c0_111 = arith.constant 0 : index
    %260 = vector.load %arg10[%c0_110, %c0_111] : memref<8x32xf32, #tpu.memory_space<vmem>>, vector<8x32xf32>
    %261 = arith.mulf %258, %260 : vector<8x32xf32>
    %262 = arith.mulf %257, %256 : vector<8x32xf32>
    %263 = arith.addf %261, %262 : vector<8x32xf32>
    %264 = math.tanh %263 : vector<8x32xf32>
    %265 = arith.mulf %259, %264 : vector<8x32xf32>
    %c0_112 = arith.constant 0 : index
    %c0_113 = arith.constant 0 : index
    %266 = vector.load %arg10[%c0_112, %c0_113] : memref<8x32xf32, #tpu.memory_space<vmem>>, vector<8x32xf32>
    tpu.vector_store %arg10[%c0_112, %c0_113], %263 {strides = array<i32>} : memref<8x32xf32, #tpu.memory_space<vmem>>, vector<8x32xf32>,
    %c0_114 = arith.constant 0 : index
    %c0_115 = arith.constant 0 : index
    %267 = vector.load %arg9[%c0_114, %c0_115] : memref<8x32xf32, #tpu.memory_space<vmem>>, vector<8x32xf32>
    tpu.vector_store %arg9[%c0_114, %c0_115], %265 {strides = array<i32>} : memref<8x32xf32, #tpu.memory_space<vmem>>, vector<8x32xf32>,
    %268 = arith.truncf %265 : vector<8x32xf32> to vector<8x32xbf16>
    %cst_116 = arith.constant dense<0.000000e+00> : vector<8x128xf32>
    %269 = tpu.matmul %268, %11, %cst_116 {dimension_numbers = #tpu.dot_dimension_numbers<[1], [0], [0], [1], [0, 0, 1, 1], [], []>} : vector<8x32xbf16>, vector<32x128xbf16>, vector<8x128xf32> -> vector<8x128xf32>
    %270 = vector.broadcast %12 : vector<1x128xf32> to vector<8x128xf32>
    %271 = arith.addf %269, %270 : vector<8x128xf32>
    %272 = arith.negf %271 : vector<8x128xf32>
    %273 = math.exp %272 : vector<8x128xf32>
    %cst_117 = arith.constant 1.000000e+00 : f32
    %274 = vector.broadcast %cst_117 : f32 to vector<8x128xf32>
    %275 = arith.addf %274, %273 : vector<8x128xf32>
    %276 = arith.divf %274, %275 : vector<8x128xf32>
    %277 = arith.index_cast %242 : i32 to index
    %c0_118 = arith.constant 0 : index
    %278 = vector.load %arg7[%277, %c0_118] : memref<64x128xf32, #tpu.memory_space<vmem>>, vector<8x128xf32>
    tpu.vector_store %arg7[%277, %c0_118], %276 {strides = array<i32>} : memref<64x128xf32, #tpu.memory_space<vmem>>, vector<8x128xf32>,
    %c7_i32 = arith.constant 7 : i32
    %c8_i32_119 = arith.constant 8 : i32
    %279 = arith.muli %c7_i32, %c8_i32_119 : i32
    %280 = tpu.assume_multiple %279, 8 : i32
    %c0_120 = arith.constant 0 : index
    %c0_121 = arith.constant 0 : index
    %281 = vector.load %arg9[%c0_120, %c0_121] : memref<8x32xf32, #tpu.memory_space<vmem>>, vector<8x32xf32>
    %282 = arith.truncf %281 : vector<8x32xf32> to vector<8x32xbf16>
    %283 = arith.index_cast %280 : i32 to index
    %c0_122 = arith.constant 0 : index
    %284 = vector.load %arg11[%283, %c0_122] : memref<64x128xf32, #tpu.memory_space<vmem>>, vector<8x128xf32>
    %cst_123 = arith.constant dense<0.000000e+00> : vector<8x128xf32>
    %285 = tpu.matmul %282, %10, %cst_123 {dimension_numbers = #tpu.dot_dimension_numbers<[1], [0], [0], [1], [0, 0, 1, 1], [], []>} : vector<8x32xbf16>, vector<32x128xbf16>, vector<8x128xf32> -> vector<8x128xf32>
    %286 = arith.addf %284, %285 : vector<8x128xf32>
    %287 = vector.extract_strided_slice %286 {offsets = [0, 0], sizes = [8, 96], strides = [1, 1]} : vector<8x128xf32> to vector<8x96xf32>
    %288 = arith.negf %287 : vector<8x96xf32>
    %289 = math.exp %288 : vector<8x96xf32>
    %cst_124 = arith.constant 1.000000e+00 : f32
    %290 = vector.broadcast %cst_124 : f32 to vector<8x96xf32>
    %291 = arith.addf %290, %289 : vector<8x96xf32>
    %292 = arith.divf %290, %291 : vector<8x96xf32>
    %293 = vector.extract_strided_slice %286 {offsets = [0, 96], sizes = [8, 32], strides = [1, 1]} : vector<8x128xf32> to vector<8x32xf32>
    %294 = math.tanh %293 : vector<8x32xf32>
    %295 = vector.extract_strided_slice %292 {offsets = [0, 0], sizes = [8, 32], strides = [1, 1]} : vector<8x96xf32> to vector<8x32xf32>
    %296 = vector.extract_strided_slice %292 {offsets = [0, 32], sizes = [8, 32], strides = [1, 1]} : vector<8x96xf32> to vector<8x32xf32>
    %297 = vector.extract_strided_slice %292 {offsets = [0, 64], sizes = [8, 32], strides = [1, 1]} : vector<8x96xf32> to vector<8x32xf32>
    %c0_125 = arith.constant 0 : index
    %c0_126 = arith.constant 0 : index
    %298 = vector.load %arg10[%c0_125, %c0_126] : memref<8x32xf32, #tpu.memory_space<vmem>>, vector<8x32xf32>
    %299 = arith.mulf %296, %298 : vector<8x32xf32>
    %300 = arith.mulf %295, %294 : vector<8x32xf32>
    %301 = arith.addf %299, %300 : vector<8x32xf32>
    %302 = math.tanh %301 : vector<8x32xf32>
    %303 = arith.mulf %297, %302 : vector<8x32xf32>
    %c0_127 = arith.constant 0 : index
    %c0_128 = arith.constant 0 : index
    %304 = vector.load %arg10[%c0_127, %c0_128] : memref<8x32xf32, #tpu.memory_space<vmem>>, vector<8x32xf32>
    tpu.vector_store %arg10[%c0_127, %c0_128], %301 {strides = array<i32>} : memref<8x32xf32, #tpu.memory_space<vmem>>, vector<8x32xf32>,
    %c0_129 = arith.constant 0 : index
    %c0_130 = arith.constant 0 : index
    %305 = vector.load %arg9[%c0_129, %c0_130] : memref<8x32xf32, #tpu.memory_space<vmem>>, vector<8x32xf32>
    tpu.vector_store %arg9[%c0_129, %c0_130], %303 {strides = array<i32>} : memref<8x32xf32, #tpu.memory_space<vmem>>, vector<8x32xf32>,
    %306 = arith.truncf %303 : vector<8x32xf32> to vector<8x32xbf16>
    %cst_131 = arith.constant dense<0.000000e+00> : vector<8x128xf32>
    %307 = tpu.matmul %306, %11, %cst_131 {dimension_numbers = #tpu.dot_dimension_numbers<[1], [0], [0], [1], [0, 0, 1, 1], [], []>} : vector<8x32xbf16>, vector<32x128xbf16>, vector<8x128xf32> -> vector<8x128xf32>
    %308 = vector.broadcast %12 : vector<1x128xf32> to vector<8x128xf32>
    %309 = arith.addf %307, %308 : vector<8x128xf32>
    %310 = arith.negf %309 : vector<8x128xf32>
    %311 = math.exp %310 : vector<8x128xf32>
    %cst_132 = arith.constant 1.000000e+00 : f32
    %312 = vector.broadcast %cst_132 : f32 to vector<8x128xf32>
    %313 = arith.addf %312, %311 : vector<8x128xf32>
    %314 = arith.divf %312, %313 : vector<8x128xf32>
    %315 = arith.index_cast %280 : i32 to index
    %c0_133 = arith.constant 0 : index
    %316 = vector.load %arg7[%315, %c0_133] : memref<64x128xf32, #tpu.memory_space<vmem>>, vector<8x128xf32>
    tpu.vector_store %arg7[%315, %c0_133], %314 {strides = array<i32>} : memref<64x128xf32, #tpu.memory_space<vmem>>, vector<8x128xf32>,
    %c8_i32_134 = arith.constant 8 : i32
    %c0_135 = arith.constant 0 : index
    %c0_136 = arith.constant 0 : index
    %317 = vector.load %arg9[%c0_135, %c0_136] : memref<8x32xf32, #tpu.memory_space<vmem>>, vector<8x32xf32>
    %c0_137 = arith.constant 0 : index
    %c0_138 = arith.constant 0 : index
    %318 = vector.load %arg8[%c0_137, %c0_138] : memref<8x32xf32, #tpu.memory_space<vmem>>, vector<8x32xf32>
    tpu.vector_store %arg8[%c0_137, %c0_138], %317 {strides = array<i32>} : memref<8x32xf32, #tpu.memory_space<vmem>>, vector<8x32xf32>,
    return
  }
  func.func @transform_0(%arg0: i32) -> (i32, i32) {
    %c0_i32 = arith.constant 0 : i32
    %c0_i32_0 = arith.constant 0 : i32
    return %arg0, %c0_i32 : i32, i32
  }
  func.func @transform_1(%arg0: i32) -> (i32, i32) {
    %c0_i32 = arith.constant 0 : i32
    %c0_i32_0 = arith.constant 0 : i32
    %c0_i32_1 = arith.constant 0 : i32
    return %c0_i32, %c0_i32_0 : i32, i32
  }
  func.func @transform_2(%arg0: i32) -> (i32, i32) {
    %c0_i32 = arith.constant 0 : i32
    %c0_i32_0 = arith.constant 0 : i32
    %c0_i32_1 = arith.constant 0 : i32
    return %c0_i32, %c0_i32_0 : i32, i32
  }
  func.func @transform_3(%arg0: i32) -> (i32, i32) {
    %c0_i32 = arith.constant 0 : i32
    %c0_i32_0 = arith.constant 0 : i32
    %c0_i32_1 = arith.constant 0 : i32
    return %c0_i32, %c0_i32_0 : i32, i32
  }
  func.func @transform_4(%arg0: i32) -> (i32, i32) {
    %c0_i32 = arith.constant 0 : i32
    %c0_i32_0 = arith.constant 0 : i32
    %c0_i32_1 = arith.constant 0 : i32
    return %c0_i32, %c0_i32_0 : i32, i32
  }
  func.func @transform_5(%arg0: i32) -> (i32, i32) {
    %c0_i32 = arith.constant 0 : i32
    %c0_i32_0 = arith.constant 0 : i32
    %c0_i32_1 = arith.constant 0 : i32
    return %c0_i32, %c0_i32_0 : i32, i32
  }
  func.func @transform_6(%arg0: i32) -> (i32, i32) {
    %c0_i32 = arith.constant 0 : i32
    %c0_i32_0 = arith.constant 0 : i32
    return %arg0, %c0_i32 : i32, i32
  }
  func.func @transform_7(%arg0: i32) -> (i32, i32) {
    %c0_i32 = arith.constant 0 : i32
    %c0_i32_0 = arith.constant 0 : i32
    %c0_i32_1 = arith.constant 0 : i32
    return %c0_i32, %c0_i32_0 : i32, i32
  }
}

</mosaic_0001>

<llo_original>
// kernel: decoder_forward.1
$region0: #{decoder_forward.1}
  #allocation0 [shape = 'u32[]', space=smem, size = 0x4, offset = 0x4, fixed_abs, tag = 'smem constant byte address 0x4 - core index']
  #allocation1 [shape = 'u32[72,128]{1,0:T(1,128)}', space=vmem, size = 0x9000, scoped, tag = 'internal scratch']
  #allocation2 [shape = 'f32[8,32]{1,0:T(8,128)}', space=vmem, size = 0x1000, scoped, tag = 'scratch operand']
  #allocation3 [shape = 'f32[8,32]{1,0:T(8,128)}', space=vmem, size = 0x1000, scoped, tag = 'scratch operand']
  #allocation4 [shape = 'f32[64,128]{1,0:T(8,128)}', space=vmem, size = 0x8000, scoped, tag = 'scratch operand']
  %s0 = inlined_call_operand.vmem [shape: bf16[64,32], index: 0, kind: input, shape index: {}]
  %s1 = inlined_call_operand.vmem [shape: bf16[32,128], index: 1, kind: input, shape index: {}]
  %s2 = inlined_call_operand.vmem [shape: bf16[32,128], index: 2, kind: input, shape index: {}]
  %s3 = inlined_call_operand.vmem [shape: f32[1,128], index: 3, kind: input, shape index: {}]
  %s4 = inlined_call_operand.vmem [shape: bf16[32,128], index: 4, kind: input, shape index: {}]
  %s5 = inlined_call_operand.vmem [shape: f32[1,128], index: 5, kind: input, shape index: {}]
  %s6 = inlined_call_operand.vmem [shape: f32[64,128], index: 6, kind: output, shape index: {0}]
  %s7 = inlined_call_operand.vmem [shape: f32[8,32], index: 7, kind: output, shape index: {1}]
  %8 = xla_tuple %s6, %s7
  %s9 = sld [smem:[#allocation0]]
  $region46: #{decoder_forward.1} parent=0
    _
  %s11 = ssub.s32 1, %s9
  %s12 = scalar_select 0, %s11, %s9
  // Predicated region
  $region2: #{decoder_forward.1} parent=0 // pred_check
    _
  $region3: #{decoder_forward.1} parent=0 // pred_check_branch
    %14 = sbr.rel (0) target = $region5
  $region4: #{decoder_forward.1} parent=0 // pred_region
    _
  $region5: #{decoder_forward.1} parent=0 // pred_fallthru
    _
  // Predicated region
  $region6: #{decoder_forward.1} parent=0 // pred_check
    _
  $region7: #{decoder_forward.1} parent=0 // pred_check_branch
    %16 = sbr.rel (0) target = $region9
  $region8: #{decoder_forward.1} parent=0 // pred_region
    _
  $region9: #{decoder_forward.1} parent=0 // pred_fallthru
    _
  // Predicated region
  $region10: #{decoder_forward.1} parent=0 // pred_check
    _
  $region11: #{decoder_forward.1} parent=0 // pred_check_branch
    %18 = sbr.rel (0) target = $region13
  $region12: #{decoder_forward.1} parent=0 // pred_region
    _
  $region13: #{decoder_forward.1} parent=0 // pred_fallthru
    _
  // Predicated region
  $region14: #{decoder_forward.1} parent=0 // pred_check
    _
  $region15: #{decoder_forward.1} parent=0 // pred_check_branch
    %20 = sbr.rel (0) target = $region17
  $region16: #{decoder_forward.1} parent=0 // pred_region
    _
  $region17: #{decoder_forward.1} parent=0 // pred_fallthru
    _
  // Predicated region
  $region18: #{decoder_forward.1} parent=0 // pred_check
    _
  $region19: #{decoder_forward.1} parent=0 // pred_check_branch
    %22 = sbr.rel (0) target = $region21
  $region20: #{decoder_forward.1} parent=0 // pred_region
    _
  $region21: #{decoder_forward.1} parent=0 // pred_fallthru
    _
  // Predicated region
  $region22: #{decoder_forward.1} parent=0 // pred_check
    _
  $region23: #{decoder_forward.1} parent=0 // pred_check_branch
    %24 = sbr.rel (0) target = $region25
  $region24: #{decoder_forward.1} parent=0 // pred_region
    _
  $region25: #{decoder_forward.1} parent=0 // pred_fallthru
    _
  %p26 = scmp.eq.s32.totalorder 0, 0
  // Predicated region
  $region26: #{decoder_forward.1} parent=0 // pred_check
    %p27 = pneg %p26
  $region27: #{decoder_forward.1} parent=0 // pred_check_branch
    %29 = sbr.rel (%p27) target = $region29
  $region28: #{decoder_forward.1} parent=0 // pred_region
    %vm30 = vcmask 261120
    %31 = vst.msk [vmem:[#allocation2] sm:$0xff] %vm30, 0.0
    %32 = vst.msk [vmem:[#allocation3] sm:$0xff] %vm30, 0.0
  $region29: #{decoder_forward.1} parent=0 // pred_fallthru
    _
  %v33 = vld [vmem:[%s0] sm:$0xf]
  %v34 = vld [vmem:[%s0 + $0x4] sm:$0xf]
  %v35 = vld [vmem:[%s0 + $0x8] sm:$0xf]
  %v36 = vld [vmem:[%s0 + $0xc] sm:$0xf]
  %v37 = vld [vmem:[%s0 + $0x10] sm:$0xf]
  %v38 = vld [vmem:[%s0 + $0x14] sm:$0xf]
  %v39 = vld [vmem:[%s0 + $0x18] sm:$0xf]
  %v40 = vld [vmem:[%s0 + $0x1c] sm:$0xf]
  %v41 = vld [vmem:[%s1] sm:$0xf]
  %v42 = vld [vmem:[%s1 + $0x4] sm:$0xf]
  %v43 = vld [vmem:[%s1 + $0x8] sm:$0xf]
  %v44 = vld [vmem:[%s1 + $0xc] sm:$0xf]
  %v45 = vld [vmem:[%s3] sm:$0x1]
  %v47 = vperm.slane %v45, 0
  %v57 = vunpack.c.l.b16 %v33
  %v58 = vunpack.c.l.b16 %v34
  %v59 = vunpack.c.l.b16 %v35
  %v60 = vunpack.c.l.b16 %v36
  %v61 = vunpack.c.l.b16 %v37
  %v62 = vunpack.c.l.b16 %v38
  %v63 = vunpack.c.l.b16 %v39
  %v64 = vunpack.c.l.b16 %v40
  %v65 = vpack.c.b16 %v58, %v57
  %v66 = vpack.c.b16 %v60, %v59
  %v67 = vpack.c.b16 %v62, %v61
  %v68 = vpack.c.b16 %v64, %v63
  %v73 = vunpack.c.l.b16 %v41
  %v74 = vunpack.c.l.b16 %v42
  %v75 = vunpack.c.l.b16 %v43
  %v76 = vunpack.c.l.b16 %v44
  %v77 = vpack.c.b16 %v74, %v73
  %v78 = vpack.c.b16 %v76, %v75
  %vm81 = vcmask 261120
  %v83 = vsel %vm81, %v65, 0
  %v86 = vsel %vm81, %v66, 0
  %v89 = vsel %vm81, %v67, 0
  %v92 = vsel %vm81, %v68, 0
  %94 = vmatpush.bf16.msra.mxu0 0
  %95 = vmatpush.bf16.msra.mxu0 0
  %96 = vmatpush.bf16.msra.mxu0 0
  %97 = vmatpush.bf16.msra.mxu0 0
  %98 = vmatpush.bf16.msra.mxu0 0
  %99 = vmatpush.bf16.msra.mxu0 0
  %100 = vmatpush.bf16.msra.mxu0 %v78
  %101 = vmatpush.bf16.msra.mxu0 %v77
  %102 = vmatmul.bf16.gmra.mxu0 %v83
  %v103 = vpop.f32.mrf.mxu0
  %v104 = vadd.f32 %v47, %v103
  %v105 = vpop.f32.mrf.mxu0
  %v106 = vadd.f32 %v47, %v105
  %107 = vmatmul.bf16.gmra.mxu0 %v86
  %v108 = vpop.f32.mrf.mxu0
  %v109 = vadd.f32 %v47, %v108
  %v110 = vpop.f32.mrf.mxu0
  %v111 = vadd.f32 %v47, %v110
  %112 = vmatmul.bf16.gmra.mxu0 %v89
  %v113 = vpop.f32.mrf.mxu0
  %v114 = vadd.f32 %v47, %v113
  %v115 = vpop.f32.mrf.mxu0
  %v116 = vadd.f32 %v47, %v115
  %117 = vmatmul.bf16.gmra.mxu0 %v92
  %v118 = vpop.f32.mrf.mxu0
  %v119 = vadd.f32 %v47, %v118
  %v120 = vpop.f32.mrf.mxu0
  %v121 = vadd.f32 %v47, %v120
  %122 = vdwg.mxu0
  %123 = vst [vmem:[#allocation4] sm:$0xff] %v104
  %124 = vst [vmem:[#allocation4 + $0x8] sm:$0xff] %v106
  %125 = vst [vmem:[#allocation4 + $0x10] sm:$0xff] %v109
  %126 = vst [vmem:[#allocation4 + $0x18] sm:$0xff] %v111
  %127 = vst [vmem:[#allocation4 + $0x20] sm:$0xff] %v114
  %128 = vst [vmem:[#allocation4 + $0x28] sm:$0xff] %v116
  %129 = vst [vmem:[#allocation4 + $0x30] sm:$0xff] %v119
  %130 = vst [vmem:[#allocation4 + $0x38] sm:$0xff] %v121
  %v131 = vld [vmem:[%s2] sm:$0xf]
  %v132 = vld [vmem:[%s2 + $0x4] sm:$0xf]
  %v133 = vld [vmem:[%s2 + $0x8] sm:$0xf]
  %v134 = vld [vmem:[%s2 + $0xc] sm:$0xf]
  %v135 = vld [vmem:[%s4] sm:$0xf]
  %v136 = vld [vmem:[%s4 + $0x4] sm:$0xf]
  %v137 = vld [vmem:[%s4 + $0x8] sm:$0xf]
  %v138 = vld [vmem:[%s4 + $0xc] sm:$0xf]
  %v139 = vld [vmem:[%s5] sm:$0x1]
  %v140 = vld [vmem:[#allocation2] sm:$0xff]
  %v141 = vpack.c.bf16 %v140, %v140
  %v142 = vld [vmem:[#allocation4] sm:$0xff]
  %v147 = vunpack.c.l.b16 %v131
  %v148 = vunpack.c.l.b16 %v132
  %v149 = vunpack.c.l.b16 %v133
  %v150 = vunpack.c.l.b16 %v134
  %v151 = vpack.c.b16 %v148, %v147
  %v152 = vpack.c.b16 %v150, %v149
  %v156 = vsel %vm81, %v141, 0
  %158 = vmatpush.bf16.msra.mxu0 0
  %159 = vmatpush.bf16.msra.mxu0 0
  %160 = vmatpush.bf16.msra.mxu0 0
  %161 = vmatpush.bf16.msra.mxu0 0
  %162 = vmatpush.bf16.msra.mxu0 0
  %163 = vmatpush.bf16.msra.mxu0 0
  %164 = vmatpush.bf16.msra.mxu0 %v152
  %165 = vmatpush.bf16.msra.mxu0 %v151
  %166 = vmatmul.bf16.gmra.mxu0 %v156
  %v167 = vpop.f32.mrf.mxu0
  %v168 = vadd.f32 0.0, %v167
  %v169 = vpop.f32.mrf.mxu0
  %170 = vdwg.mxu0
  %v171 = vadd.f32 %v142, %v168
  %v172 = vxor.u32 %v171, 2147483648
  %v173 = vmul.f32 %v172, 1.442695
  %v174 = vpow.pop %v173
  %v175 = vadd.f32 %v174, 1.0
  %v176 = vrcp.pop %v175
  %v177 = vmul.f32 %v175, %v176
  %v178 = vsub.f32 1.0, %v177
  %v179 = vmul.f32 %v176, %v178
  %v180 = vadd.f32 %v176, %v179
  %vm181 = vweird.f32 %v175
  %vm182 = vweird.f32 %v176
  %vm183 = vmor %vm181, %vm182
  %v184 = vsel %vm183, %v176, %v180
  %v185 = vand.u32 2147483647, %v175
  %vm186 = vcmp.eq.f32.partialorder %v185, 8.507059e+37
  %v187 = vand.u32 %v175, 2147483648
  %v188 = vor.u32 1.1754944e-38, %v187
  %v189 = vsel %vm186, %v188, %v184
  %v190 = vmul.f32 1.0, %v189
  %v191 = vtanh.pop %v171
  %v192 = vld [vmem:[#allocation3] sm:$0xff]
  %194 = vrot.lane.b32.xlu0 %v192, 32
  %v195 = vpop.permute.xlu0 %194
  %v197 = vmul.f32 %v190, %v195
  %199 = vrot.lane.b32.xlu0 %v191, 32
  %v200 = vpop.permute.xlu0 %199
  %v202 = vmul.f32 %v190, %v200
  %204 = vrot.lane.b32.xlu0 %v202, 32
  %v205 = vpop.permute.xlu0 %204
  %v207 = vadd.f32 %v197, %v205
  %v208 = vtanh.pop %v207
  %210 = vrot.lane.b32.xlu0 %v208, 32
  %v211 = vpop.permute.xlu0 %210
  %v213 = vmul.f32 %v190, %v211
  %215 = vrot.lane.b32.xlu0 %v207, 96
  %v216 = vpop.permute.xlu0 %215
  %218 = vst.msk [vmem:[#allocation3] sm:$0xff] %vm81, %v216
  %220 = vrot.lane.b32.xlu0 %v213, 64
  %v221 = vpop.permute.xlu0 %220
  %223 = vst.msk [vmem:[#allocation2] sm:$0xff] %vm81, %v221
  %v224 = vpack.c.bf16 %v213, %v213
  %v226 = vperm.slane %v139, 0
  %229 = vrot.lane.b32.xlu0 %v224, 64
  %v230 = vpop.permute.xlu0 %229
  %v235 = vunpack.c.l.b16 %v135
  %v236 = vunpack.c.l.b16 %v136
  %v237 = vunpack.c.l.b16 %v137
  %v238 = vunpack.c.l.b16 %v138
  %v239 = vpack.c.b16 %v236, %v235
  %v240 = vpack.c.b16 %v238, %v237
  %v244 = vsel %vm81, %v230, 0
  %246 = vmatpush.bf16.msra.mxu0 0
  %247 = vmatpush.bf16.msra.mxu0 0
  %248 = vmatpush.bf16.msra.mxu0 0
  %249 = vmatpush.bf16.msra.mxu0 0
  %250 = vmatpush.bf16.msra.mxu0 0
  %251 = vmatpush.bf16.msra.mxu0 0
  %252 = vmatpush.bf16.msra.mxu0 %v240
  %253 = vmatpush.bf16.msra.mxu0 %v239
  %254 = vmatmul.bf16.gmra.mxu0 %v244
  %v255 = vpop.f32.mrf.mxu0
  %v256 = vadd.f32 %v226, %v255
  %v257 = vpop.f32.mrf.mxu0
  %258 = vdwg.mxu0
  %v259 = vxor.u32 %v256, 2147483648
  %v260 = vmul.f32 %v259, 1.442695
  %v261 = vpow.pop %v260
  %v262 = vadd.f32 %v261, 1.0
  %v263 = vrcp.pop %v262
  %v264 = vmul.f32 %v262, %v263
  %v265 = vsub.f32 1.0, %v264
  %v266 = vmul.f32 %v263, %v265
  %v267 = vadd.f32 %v263, %v266
  %vm268 = vweird.f32 %v262
  %vm269 = vweird.f32 %v263
  %vm270 = vmor %vm268, %vm269
  %v271 = vsel %vm270, %v263, %v267
  %v272 = vand.u32 2147483647, %v262
  %vm273 = vcmp.eq.f32.partialorder %v272, 8.507059e+37
  %v274 = vand.u32 %v262, 2147483648
  %v275 = vor.u32 1.1754944e-38, %v274
  %v276 = vsel %vm273, %v275, %v271
  %v277 = vmul.f32 1.0, %v276
  %278 = vst [vmem:[%s6] sm:$0xff] %v277
  %v279 = vld [vmem:[#allocation2] sm:$0xff]
  %v280 = vpack.c.bf16 %v279, %v279
  %s281 = scalar_lea.vmem [#allocation4], 8
  %v282 = vld [vmem:[%s281] sm:$0xff]
  %v284 = vsel %vm81, %v280, 0
  %286 = vmatpush.bf16.msra.mxu0 0
  %287 = vmatpush.bf16.msra.mxu0 0
  %288 = vmatpush.bf16.msra.mxu0 0
  %289 = vmatpush.bf16.msra.mxu0 0
  %290 = vmatpush.bf16.msra.mxu0 0
  %291 = vmatpush.bf16.msra.mxu0 0
  %292 = vmatpush.bf16.msra.mxu0 %v152
  %293 = vmatpush.bf16.msra.mxu0 %v151
  %294 = vmatmul.bf16.gmra.mxu0 %v284
  %v295 = vpop.f32.mrf.mxu0
  %v296 = vadd.f32 0.0, %v295
  %v297 = vpop.f32.mrf.mxu0
  %298 = vdwg.mxu0
  %v299 = vadd.f32 %v282, %v296
  %v300 = vxor.u32 %v299, 2147483648
  %v301 = vmul.f32 %v300, 1.442695
  %v302 = vpow.pop %v301
  %v303 = vadd.f32 %v302, 1.0
  %v304 = vrcp.pop %v303
  %v305 = vmul.f32 %v303, %v304
  %v306 = vsub.f32 1.0, %v305
  %v307 = vmul.f32 %v304, %v306
  %v308 = vadd.f32 %v304, %v307
  %vm309 = vweird.f32 %v303
  %vm310 = vweird.f32 %v304
  %vm311 = vmor %vm309, %vm310
  %v312 = vsel %vm311, %v304, %v308
  %v313 = vand.u32 2147483647, %v303
  %vm314 = vcmp.eq.f32.partialorder %v313, 8.507059e+37
  %v315 = vand.u32 %v303, 2147483648
  %v316 = vor.u32 1.1754944e-38, %v315
  %v317 = vsel %vm314, %v316, %v312
  %v318 = vmul.f32 1.0, %v317
  %v319 = vtanh.pop %v299
  %v320 = vld [vmem:[#allocation3] sm:$0xff]
  %322 = vrot.lane.b32.xlu0 %v320, 32
  %v323 = vpop.permute.xlu0 %322
  %v325 = vmul.f32 %v318, %v323
  %327 = vrot.lane.b32.xlu0 %v319, 32
  %v328 = vpop.permute.xlu0 %327
  %v330 = vmul.f32 %v318, %v328
  %332 = vrot.lane.b32.xlu0 %v330, 32
  %v333 = vpop.permute.xlu0 %332
  %v335 = vadd.f32 %v325, %v333
  %v336 = vtanh.pop %v335
  %338 = vrot.lane.b32.xlu0 %v336, 32
  %v339 = vpop.permute.xlu0 %338
  %v341 = vmul.f32 %v318, %v339
  %343 = vrot.lane.b32.xlu0 %v335, 96
  %v344 = vpop.permute.xlu0 %343
  %346 = vst.msk [vmem:[#allocation3] sm:$0xff] %vm81, %v344
  %348 = vrot.lane.b32.xlu0 %v341, 64
  %v349 = vpop.permute.xlu0 %348
  %351 = vst.msk [vmem:[#allocation2] sm:$0xff] %vm81, %v349
  %v352 = vpack.c.bf16 %v341, %v341
  %354 = vrot.lane.b32.xlu0 %v352, 64
  %v355 = vpop.permute.xlu0 %354
  %v357 = vsel %vm81, %v355, 0
  %359 = vmatpush.bf16.msra.mxu0 0
  %360 = vmatpush.bf16.msra.mxu0 0
  %361 = vmatpush.bf16.msra.mxu0 0
  %362 = vmatpush.bf16.msra.mxu0 0
  %363 = vmatpush.bf16.msra.mxu0 0
  %364 = vmatpush.bf16.msra.mxu0 0
  %365 = vmatpush.bf16.msra.mxu0 %v240
  %366 = vmatpush.bf16.msra.mxu0 %v239
  %367 = vmatmul.bf16.gmra.mxu0 %v357
  %v368 = vpop.f32.mrf.mxu0
  %v369 = vadd.f32 %v226, %v368
  %v370 = vpop.f32.mrf.mxu0
  %371 = vdwg.mxu0
  %v372 = vxor.u32 %v369, 2147483648
  %v373 = vmul.f32 %v372, 1.442695
  %v374 = vpow.pop %v373
  %v375 = vadd.f32 %v374, 1.0
  %v376 = vrcp.pop %v375
  %v377 = vmul.f32 %v375, %v376
  %v378 = vsub.f32 1.0, %v377
  %v379 = vmul.f32 %v376, %v378
  %v380 = vadd.f32 %v376, %v379
  %vm381 = vweird.f32 %v375
  %vm382 = vweird.f32 %v376
  %vm383 = vmor %vm381, %vm382
  %v384 = vsel %vm383, %v376, %v380
  %v385 = vand.u32 2147483647, %v375
  %vm386 = vcmp.eq.f32.partialorder %v385, 8.507059e+37
  %v387 = vand.u32 %v375, 2147483648
  %v388 = vor.u32 1.1754944e-38, %v387
  %v389 = vsel %vm386, %v388, %v384
  %v390 = vmul.f32 1.0, %v389
  %s391 = scalar_lea.vmem %s6, 8
  %392 = vst [vmem:[%s391] sm:$0xff] %v390
  %v393 = vld [vmem:[#allocation2] sm:$0xff]
  %v394 = vpack.c.bf16 %v393, %v393
  %s395 = scalar_lea.vmem [#allocation4], 16
  %v396 = vld [vmem:[%s395] sm:$0xff]
  %v398 = vsel %vm81, %v394, 0
  %400 = vmatpush.bf16.msra.mxu0 0
  %401 = vmatpush.bf16.msra.mxu0 0
  %402 = vmatpush.bf16.msra.mxu0 0
  %403 = vmatpush.bf16.msra.mxu0 0
  %404 = vmatpush.bf16.msra.mxu0 0
  %405 = vmatpush.bf16.msra.mxu0 0
  %406 = vmatpush.bf16.msra.mxu0 %v152
  %407 = vmatpush.bf16.msra.mxu0 %v151
  %408 = vmatmul.bf16.gmra.mxu0 %v398
  %v409 = vpop.f32.mrf.mxu0
  %v410 = vadd.f32 0.0, %v409
  %v411 = vpop.f32.mrf.mxu0
  %412 = vdwg.mxu0
  %v413 = vadd.f32 %v396, %v410
  %v414 = vxor.u32 %v413, 2147483648
  %v415 = vmul.f32 %v414, 1.442695
  %v416 = vpow.pop %v415
  %v417 = vadd.f32 %v416, 1.0
  %v418 = vrcp.pop %v417
  %v419 = vmul.f32 %v417, %v418
  %v420 = vsub.f32 1.0, %v419
  %v421 = vmul.f32 %v418, %v420
  %v422 = vadd.f32 %v418, %v421
  %vm423 = vweird.f32 %v417
  %vm424 = vweird.f32 %v418
  %vm425 = vmor %vm423, %vm424
  %v426 = vsel %vm425, %v418, %v422
  %v427 = vand.u32 2147483647, %v417
  %vm428 = vcmp.eq.f32.partialorder %v427, 8.507059e+37
  %v429 = vand.u32 %v417, 2147483648
  %v430 = vor.u32 1.1754944e-38, %v429
  %v431 = vsel %vm428, %v430, %v426
  %v432 = vmul.f32 1.0, %v431
  %v433 = vtanh.pop %v413
  %v434 = vld [vmem:[#allocation3] sm:$0xff]
  %436 = vrot.lane.b32.xlu0 %v434, 32
  %v437 = vpop.permute.xlu0 %436
  %v439 = vmul.f32 %v432, %v437
  %441 = vrot.lane.b32.xlu0 %v433, 32
  %v442 = vpop.permute.xlu0 %441
  %v444 = vmul.f32 %v432, %v442
  %446 = vrot.lane.b32.xlu0 %v444, 32
  %v447 = vpop.permute.xlu0 %446
  %v449 = vadd.f32 %v439, %v447
  %v450 = vtanh.pop %v449
  %452 = vrot.lane.b32.xlu0 %v450, 32
  %v453 = vpop.permute.xlu0 %452
  %v455 = vmul.f32 %v432, %v453
  %457 = vrot.lane.b32.xlu0 %v449, 96
  %v458 = vpop.permute.xlu0 %457
  %460 = vst.msk [vmem:[#allocation3] sm:$0xff] %vm81, %v458
  %462 = vrot.lane.b32.xlu0 %v455, 64
  %v463 = vpop.permute.xlu0 %462
  %465 = vst.msk [vmem:[#allocation2] sm:$0xff] %vm81, %v463
  %v466 = vpack.c.bf16 %v455, %v455
  %468 = vrot.lane.b32.xlu0 %v466, 64
  %v469 = vpop.permute.xlu0 %468
  %v471 = vsel %vm81, %v469, 0
  %473 = vmatpush.bf16.msra.mxu0 0
  %474 = vmatpush.bf16.msra.mxu0 0
  %475 = vmatpush.bf16.msra.mxu0 0
  %476 = vmatpush.bf16.msra.mxu0 0
  %477 = vmatpush.bf16.msra.mxu0 0
  %478 = vmatpush.bf16.msra.mxu0 0
  %479 = vmatpush.bf16.msra.mxu0 %v240
  %480 = vmatpush.bf16.msra.mxu0 %v239
  %481 = vmatmul.bf16.gmra.mxu0 %v471
  %v482 = vpop.f32.mrf.mxu0
  %v483 = vadd.f32 %v226, %v482
  %v484 = vpop.f32.mrf.mxu0
  %485 = vdwg.mxu0
  %v486 = vxor.u32 %v483, 2147483648
  %v487 = vmul.f32 %v486, 1.442695
  %v488 = vpow.pop %v487
  %v489 = vadd.f32 %v488, 1.0
  %v490 = vrcp.pop %v489
  %v491 = vmul.f32 %v489, %v490
  %v492 = vsub.f32 1.0, %v491
  %v493 = vmul.f32 %v490, %v492
  %v494 = vadd.f32 %v490, %v493
  %vm495 = vweird.f32 %v489
  %vm496 = vweird.f32 %v490
  %vm497 = vmor %vm495, %vm496
  %v498 = vsel %vm497, %v490, %v494
  %v499 = vand.u32 2147483647, %v489
  %vm500 = vcmp.eq.f32.partialorder %v499, 8.507059e+37
  %v501 = vand.u32 %v489, 2147483648
  %v502 = vor.u32 1.1754944e-38, %v501
  %v503 = vsel %vm500, %v502, %v498
  %v504 = vmul.f32 1.0, %v503
  %s505 = scalar_lea.vmem %s6, 16
  %506 = vst [vmem:[%s505] sm:$0xff] %v504
  %v507 = vld [vmem:[#allocation2] sm:$0xff]
  %v508 = vpack.c.bf16 %v507, %v507
  %s509 = scalar_lea.vmem [#allocation4], 24
  %v510 = vld [vmem:[%s509] sm:$0xff]
  %v512 = vsel %vm81, %v508, 0
  %514 = vmatpush.bf16.msra.mxu0 0
  %515 = vmatpush.bf16.msra.mxu0 0
  %516 = vmatpush.bf16.msra.mxu0 0
  %517 = vmatpush.bf16.msra.mxu0 0
  %518 = vmatpush.bf16.msra.mxu0 0
  %519 = vmatpush.bf16.msra.mxu0 0
  %520 = vmatpush.bf16.msra.mxu0 %v152
  %521 = vmatpush.bf16.msra.mxu0 %v151
  %522 = vmatmul.bf16.gmra.mxu0 %v512
  %v523 = vpop.f32.mrf.mxu0
  %v524 = vadd.f32 0.0, %v523
  %v525 = vpop.f32.mrf.mxu0
  %526 = vdwg.mxu0
  %v527 = vadd.f32 %v510, %v524
  %v528 = vxor.u32 %v527, 2147483648
  %v529 = vmul.f32 %v528, 1.442695
  %v530 = vpow.pop %v529
  %v531 = vadd.f32 %v530, 1.0
  %v532 = vrcp.pop %v531
  %v533 = vmul.f32 %v531, %v532
  %v534 = vsub.f32 1.0, %v533
  %v535 = vmul.f32 %v532, %v534
  %v536 = vadd.f32 %v532, %v535
  %vm537 = vweird.f32 %v531
  %vm538 = vweird.f32 %v532
  %vm539 = vmor %vm537, %vm538
  %v540 = vsel %vm539, %v532, %v536
  %v541 = vand.u32 2147483647, %v531
  %vm542 = vcmp.eq.f32.partialorder %v541, 8.507059e+37
  %v543 = vand.u32 %v531, 2147483648
  %v544 = vor.u32 1.1754944e-38, %v543
  %v545 = vsel %vm542, %v544, %v540
  %v546 = vmul.f32 1.0, %v545
  %v547 = vtanh.pop %v527
  %v548 = vld [vmem:[#allocation3] sm:$0xff]
  %550 = vrot.lane.b32.xlu0 %v548, 32
  %v551 = vpop.permute.xlu0 %550
  %v553 = vmul.f32 %v546, %v551
  %555 = vrot.lane.b32.xlu0 %v547, 32
  %v556 = vpop.permute.xlu0 %555
  %v558 = vmul.f32 %v546, %v556
  %560 = vrot.lane.b32.xlu0 %v558, 32
  %v561 = vpop.permute.xlu0 %560
  %v563 = vadd.f32 %v553, %v561
  %v564 = vtanh.pop %v563
  %566 = vrot.lane.b32.xlu0 %v564, 32
  %v567 = vpop.permute.xlu0 %566
  %v569 = vmul.f32 %v546, %v567
  %571 = vrot.lane.b32.xlu0 %v563, 96
  %v572 = vpop.permute.xlu0 %571
  %574 = vst.msk [vmem:[#allocation3] sm:$0xff] %vm81, %v572
  %576 = vrot.lane.b32.xlu0 %v569, 64
  %v577 = vpop.permute.xlu0 %576
  %579 = vst.msk [vmem:[#allocation2] sm:$0xff] %vm81, %v577
  %v580 = vpack.c.bf16 %v569, %v569
  %582 = vrot.lane.b32.xlu0 %v580, 64
  %v583 = vpop.permute.xlu0 %582
  %v585 = vsel %vm81, %v583, 0
  %587 = vmatpush.bf16.msra.mxu0 0
  %588 = vmatpush.bf16.msra.mxu0 0
  %589 = vmatpush.bf16.msra.mxu0 0
  %590 = vmatpush.bf16.msra.mxu0 0
  %591 = vmatpush.bf16.msra.mxu0 0
  %592 = vmatpush.bf16.msra.mxu0 0
  %593 = vmatpush.bf16.msra.mxu0 %v240
  %594 = vmatpush.bf16.msra.mxu0 %v239
  %595 = vmatmul.bf16.gmra.mxu0 %v585
  %v596 = vpop.f32.mrf.mxu0
  %v597 = vadd.f32 %v226, %v596
  %v598 = vpop.f32.mrf.mxu0
  %599 = vdwg.mxu0
  %v600 = vxor.u32 %v597, 2147483648
  %v601 = vmul.f32 %v600, 1.442695
  %v602 = vpow.pop %v601
  %v603 = vadd.f32 %v602, 1.0
  %v604 = vrcp.pop %v603
  %v605 = vmul.f32 %v603, %v604
  %v606 = vsub.f32 1.0, %v605
  %v607 = vmul.f32 %v604, %v606
  %v608 = vadd.f32 %v604, %v607
  %vm609 = vweird.f32 %v603
  %vm610 = vweird.f32 %v604
  %vm611 = vmor %vm609, %vm610
  %v612 = vsel %vm611, %v604, %v608
  %v613 = vand.u32 2147483647, %v603
  %vm614 = vcmp.eq.f32.partialorder %v613, 8.507059e+37
  %v615 = vand.u32 %v603, 2147483648
  %v616 = vor.u32 1.1754944e-38, %v615
  %v617 = vsel %vm614, %v616, %v612
  %v618 = vmul.f32 1.0, %v617
  %s619 = scalar_lea.vmem %s6, 24
  %620 = vst [vmem:[%s619] sm:$0xff] %v618
  %v621 = vld [vmem:[#allocation2] sm:$0xff]
  %v622 = vpack.c.bf16 %v621, %v621
  %s623 = scalar_lea.vmem [#allocation4], 32
  %v624 = vld [vmem:[%s623] sm:$0xff]
  %v626 = vsel %vm81, %v622, 0
  %628 = vmatpush.bf16.msra.mxu0 0
  %629 = vmatpush.bf16.msra.mxu0 0
  %630 = vmatpush.bf16.msra.mxu0 0
  %631 = vmatpush.bf16.msra.mxu0 0
  %632 = vmatpush.bf16.msra.mxu0 0
  %633 = vmatpush.bf16.msra.mxu0 0
  %634 = vmatpush.bf16.msra.mxu0 %v152
  %635 = vmatpush.bf16.msra.mxu0 %v151
  %636 = vmatmul.bf16.gmra.mxu0 %v626
  %v637 = vpop.f32.mrf.mxu0
  %v638 = vadd.f32 0.0, %v637
  %v639 = vpop.f32.mrf.mxu0
  %640 = vdwg.mxu0
  %v641 = vadd.f32 %v624, %v638
  %v642 = vxor.u32 %v641, 2147483648
  %v643 = vmul.f32 %v642, 1.442695
  %v644 = vpow.pop %v643
  %v645 = vadd.f32 %v644, 1.0
  %v646 = vrcp.pop %v645
  %v647 = vmul.f32 %v645, %v646
  %v648 = vsub.f32 1.0, %v647
  %v649 = vmul.f32 %v646, %v648
  %v650 = vadd.f32 %v646, %v649
  %vm651 = vweird.f32 %v645
  %vm652 = vweird.f32 %v646
  %vm653 = vmor %vm651, %vm652
  %v654 = vsel %vm653, %v646, %v650
  %v655 = vand.u32 2147483647, %v645
  %vm656 = vcmp.eq.f32.partialorder %v655, 8.507059e+37
  %v657 = vand.u32 %v645, 2147483648
  %v658 = vor.u32 1.1754944e-38, %v657
  %v659 = vsel %vm656, %v658, %v654
  %v660 = vmul.f32 1.0, %v659
  %v661 = vtanh.pop %v641
  %v662 = vld [vmem:[#allocation3] sm:$0xff]
  %664 = vrot.lane.b32.xlu0 %v662, 32
  %v665 = vpop.permute.xlu0 %664
  %v667 = vmul.f32 %v660, %v665
  %669 = vrot.lane.b32.xlu0 %v661, 32
  %v670 = vpop.permute.xlu0 %669
  %v672 = vmul.f32 %v660, %v670
  %674 = vrot.lane.b32.xlu0 %v672, 32
  %v675 = vpop.permute.xlu0 %674
  %v677 = vadd.f32 %v667, %v675
  %v678 = vtanh.pop %v677
  %680 = vrot.lane.b32.xlu0 %v678, 32
  %v681 = vpop.permute.xlu0 %680
  %v683 = vmul.f32 %v660, %v681
  %685 = vrot.lane.b32.xlu0 %v677, 96
  %v686 = vpop.permute.xlu0 %685
  %688 = vst.msk [vmem:[#allocation3] sm:$0xff] %vm81, %v686
  %690 = vrot.lane.b32.xlu0 %v683, 64
  %v691 = vpop.permute.xlu0 %690
  %693 = vst.msk [vmem:[#allocation2] sm:$0xff] %vm81, %v691
  %v694 = vpack.c.bf16 %v683, %v683
  %696 = vrot.lane.b32.xlu0 %v694, 64
  %v697 = vpop.permute.xlu0 %696
  %v699 = vsel %vm81, %v697, 0
  %701 = vmatpush.bf16.msra.mxu0 0
  %702 = vmatpush.bf16.msra.mxu0 0
  %703 = vmatpush.bf16.msra.mxu0 0
  %704 = vmatpush.bf16.msra.mxu0 0
  %705 = vmatpush.bf16.msra.mxu0 0
  %706 = vmatpush.bf16.msra.mxu0 0
  %707 = vmatpush.bf16.msra.mxu0 %v240
  %708 = vmatpush.bf16.msra.mxu0 %v239
  %709 = vmatmul.bf16.gmra.mxu0 %v699
  %v710 = vpop.f32.mrf.mxu0
  %v711 = vadd.f32 %v226, %v710
  %v712 = vpop.f32.mrf.mxu0
  %713 = vdwg.mxu0
  %v714 = vxor.u32 %v711, 2147483648
  %v715 = vmul.f32 %v714, 1.442695
  %v716 = vpow.pop %v715
  %v717 = vadd.f32 %v716, 1.0
  %v718 = vrcp.pop %v717
  %v719 = vmul.f32 %v717, %v718
  %v720 = vsub.f32 1.0, %v719
  %v721 = vmul.f32 %v718, %v720
  %v722 = vadd.f32 %v718, %v721
  %vm723 = vweird.f32 %v717
  %vm724 = vweird.f32 %v718
  %vm725 = vmor %vm723, %vm724
  %v726 = vsel %vm725, %v718, %v722
  %v727 = vand.u32 2147483647, %v717
  %vm728 = vcmp.eq.f32.partialorder %v727, 8.507059e+37
  %v729 = vand.u32 %v717, 2147483648
  %v730 = vor.u32 1.1754944e-38, %v729
  %v731 = vsel %vm728, %v730, %v726
  %v732 = vmul.f32 1.0, %v731
  %s733 = scalar_lea.vmem %s6, 32
  %734 = vst [vmem:[%s733] sm:$0xff] %v732
  %v735 = vld [vmem:[#allocation2] sm:$0xff]
  %v736 = vpack.c.bf16 %v735, %v735
  %s737 = scalar_lea.vmem [#allocation4], 40
  %v738 = vld [vmem:[%s737] sm:$0xff]
  %v740 = vsel %vm81, %v736, 0
  %742 = vmatpush.bf16.msra.mxu0 0
  %743 = vmatpush.bf16.msra.mxu0 0
  %744 = vmatpush.bf16.msra.mxu0 0
  %745 = vmatpush.bf16.msra.mxu0 0
  %746 = vmatpush.bf16.msra.mxu0 0
  %747 = vmatpush.bf16.msra.mxu0 0
  %748 = vmatpush.bf16.msra.mxu0 %v152
  %749 = vmatpush.bf16.msra.mxu0 %v151
  %750 = vmatmul.bf16.gmra.mxu0 %v740
  %v751 = vpop.f32.mrf.mxu0
  %v752 = vadd.f32 0.0, %v751
  %v753 = vpop.f32.mrf.mxu0
  %754 = vdwg.mxu0
  %v755 = vadd.f32 %v738, %v752
  %v756 = vxor.u32 %v755, 2147483648
  %v757 = vmul.f32 %v756, 1.442695
  %v758 = vpow.pop %v757
  %v759 = vadd.f32 %v758, 1.0
  %v760 = vrcp.pop %v759
  %v761 = vmul.f32 %v759, %v760
  %v762 = vsub.f32 1.0, %v761
  %v763 = vmul.f32 %v760, %v762
  %v764 = vadd.f32 %v760, %v763
  %vm765 = vweird.f32 %v759
  %vm766 = vweird.f32 %v760
  %vm767 = vmor %vm765, %vm766
  %v768 = vsel %vm767, %v760, %v764
  %v769 = vand.u32 2147483647, %v759
  %vm770 = vcmp.eq.f32.partialorder %v769, 8.507059e+37
  %v771 = vand.u32 %v759, 2147483648
  %v772 = vor.u32 1.1754944e-38, %v771
  %v773 = vsel %vm770, %v772, %v768
  %v774 = vmul.f32 1.0, %v773
  %v775 = vtanh.pop %v755
  %v776 = vld [vmem:[#allocation3] sm:$0xff]
  %778 = vrot.lane.b32.xlu0 %v776, 32
  %v779 = vpop.permute.xlu0 %778
  %v781 = vmul.f32 %v774, %v779
  %783 = vrot.lane.b32.xlu0 %v775, 32
  %v784 = vpop.permute.xlu0 %783
  %v786 = vmul.f32 %v774, %v784
  %788 = vrot.lane.b32.xlu0 %v786, 32
  %v789 = vpop.permute.xlu0 %788
  %v791 = vadd.f32 %v781, %v789
  %v792 = vtanh.pop %v791
  %794 = vrot.lane.b32.xlu0 %v792, 32
  %v795 = vpop.permute.xlu0 %794
  %v797 = vmul.f32 %v774, %v795
  %799 = vrot.lane.b32.xlu0 %v791, 96
  %v800 = vpop.permute.xlu0 %799
  %802 = vst.msk [vmem:[#allocation3] sm:$0xff] %vm81, %v800
  %804 = vrot.lane.b32.xlu0 %v797, 64
  %v805 = vpop.permute.xlu0 %804
  %807 = vst.msk [vmem:[#allocation2] sm:$0xff] %vm81, %v805
  %v808 = vpack.c.bf16 %v797, %v797
  %810 = vrot.lane.b32.xlu0 %v808, 64
  %v811 = vpop.permute.xlu0 %810
  %v813 = vsel %vm81, %v811, 0
  %815 = vmatpush.bf16.msra.mxu0 0
  %816 = vmatpush.bf16.msra.mxu0 0
  %817 = vmatpush.bf16.msra.mxu0 0
  %818 = vmatpush.bf16.msra.mxu0 0
  %819 = vmatpush.bf16.msra.mxu0 0
  %820 = vmatpush.bf16.msra.mxu0 0
  %821 = vmatpush.bf16.msra.mxu0 %v240
  %822 = vmatpush.bf16.msra.mxu0 %v239
  %823 = vmatmul.bf16.gmra.mxu0 %v813
  %v824 = vpop.f32.mrf.mxu0
  %v825 = vadd.f32 %v226, %v824
  %v826 = vpop.f32.mrf.mxu0
  %827 = vdwg.mxu0
  %v828 = vxor.u32 %v825, 2147483648
  %v829 = vmul.f32 %v828, 1.442695
  %v830 = vpow.pop %v829
  %v831 = vadd.f32 %v830, 1.0
  %v832 = vrcp.pop %v831
  %v833 = vmul.f32 %v831, %v832
  %v834 = vsub.f32 1.0, %v833
  %v835 = vmul.f32 %v832, %v834
  %v836 = vadd.f32 %v832, %v835
  %vm837 = vweird.f32 %v831
  %vm838 = vweird.f32 %v832
  %vm839 = vmor %vm837, %vm838
  %v840 = vsel %vm839, %v832, %v836
  %v841 = vand.u32 2147483647, %v831
  %vm842 = vcmp.eq.f32.partialorder %v841, 8.507059e+37
  %v843 = vand.u32 %v831, 2147483648
  %v844 = vor.u32 1.1754944e-38, %v843
  %v845 = vsel %vm842, %v844, %v840
  %v846 = vmul.f32 1.0, %v845
  %s847 = scalar_lea.vmem %s6, 40
  %848 = vst [vmem:[%s847] sm:$0xff] %v846
  %v849 = vld [vmem:[#allocation2] sm:$0xff]
  %v850 = vpack.c.bf16 %v849, %v849
  %s851 = scalar_lea.vmem [#allocation4], 48
  %v852 = vld [vmem:[%s851] sm:$0xff]
  %v854 = vsel %vm81, %v850, 0
  %856 = vmatpush.bf16.msra.mxu0 0
  %857 = vmatpush.bf16.msra.mxu0 0
  %858 = vmatpush.bf16.msra.mxu0 0
  %859 = vmatpush.bf16.msra.mxu0 0
  %860 = vmatpush.bf16.msra.mxu0 0
  %861 = vmatpush.bf16.msra.mxu0 0
  %862 = vmatpush.bf16.msra.mxu0 %v152
  %863 = vmatpush.bf16.msra.mxu0 %v151
  %864 = vmatmul.bf16.gmra.mxu0 %v854
  %v865 = vpop.f32.mrf.mxu0
  %v866 = vadd.f32 0.0, %v865
  %v867 = vpop.f32.mrf.mxu0
  %868 = vdwg.mxu0
  %v869 = vadd.f32 %v852, %v866
  %v870 = vxor.u32 %v869, 2147483648
  %v871 = vmul.f32 %v870, 1.442695
  %v872 = vpow.pop %v871
  %v873 = vadd.f32 %v872, 1.0
  %v874 = vrcp.pop %v873
  %v875 = vmul.f32 %v873, %v874
  %v876 = vsub.f32 1.0, %v875
  %v877 = vmul.f32 %v874, %v876
  %v878 = vadd.f32 %v874, %v877
  %vm879 = vweird.f32 %v873
  %vm880 = vweird.f32 %v874
  %vm881 = vmor %vm879, %vm880
  %v882 = vsel %vm881, %v874, %v878
  %v883 = vand.u32 2147483647, %v873
  %vm884 = vcmp.eq.f32.partialorder %v883, 8.507059e+37
  %v885 = vand.u32 %v873, 2147483648
  %v886 = vor.u32 1.1754944e-38, %v885
  %v887 = vsel %vm884, %v886, %v882
  %v888 = vmul.f32 1.0, %v887
  %v889 = vtanh.pop %v869
  %v890 = vld [vmem:[#allocation3] sm:$0xff]
  %892 = vrot.lane.b32.xlu0 %v890, 32
  %v893 = vpop.permute.xlu0 %892
  %v895 = vmul.f32 %v888, %v893
  %897 = vrot.lane.b32.xlu0 %v889, 32
  %v898 = vpop.permute.xlu0 %897
  %v900 = vmul.f32 %v888, %v898
  %902 = vrot.lane.b32.xlu0 %v900, 32
  %v903 = vpop.permute.xlu0 %902
  %v905 = vadd.f32 %v895, %v903
  %v906 = vtanh.pop %v905
  %908 = vrot.lane.b32.xlu0 %v906, 32
  %v909 = vpop.permute.xlu0 %908
  %v911 = vmul.f32 %v888, %v909
  %913 = vrot.lane.b32.xlu0 %v905, 96
  %v914 = vpop.permute.xlu0 %913
  %916 = vst.msk [vmem:[#allocation3] sm:$0xff] %vm81, %v914
  %918 = vrot.lane.b32.xlu0 %v911, 64
  %v919 = vpop.permute.xlu0 %918
  %921 = vst.msk [vmem:[#allocation2] sm:$0xff] %vm81, %v919
  %v922 = vpack.c.bf16 %v911, %v911
  %924 = vrot.lane.b32.xlu0 %v922, 64
  %v925 = vpop.permute.xlu0 %924
  %v927 = vsel %vm81, %v925, 0
  %929 = vmatpush.bf16.msra.mxu0 0
  %930 = vmatpush.bf16.msra.mxu0 0
  %931 = vmatpush.bf16.msra.mxu0 0
  %932 = vmatpush.bf16.msra.mxu0 0
  %933 = vmatpush.bf16.msra.mxu0 0
  %934 = vmatpush.bf16.msra.mxu0 0
  %935 = vmatpush.bf16.msra.mxu0 %v240
  %936 = vmatpush.bf16.msra.mxu0 %v239
  %937 = vmatmul.bf16.gmra.mxu0 %v927
  %v938 = vpop.f32.mrf.mxu0
  %v939 = vadd.f32 %v226, %v938
  %v940 = vpop.f32.mrf.mxu0
  %941 = vdwg.mxu0
  %v942 = vxor.u32 %v939, 2147483648
  %v943 = vmul.f32 %v942, 1.442695
  %v944 = vpow.pop %v943
  %v945 = vadd.f32 %v944, 1.0
  %v946 = vrcp.pop %v945
  %v947 = vmul.f32 %v945, %v946
  %v948 = vsub.f32 1.0, %v947
  %v949 = vmul.f32 %v946, %v948
  %v950 = vadd.f32 %v946, %v949
  %vm951 = vweird.f32 %v945
  %vm952 = vweird.f32 %v946
  %vm953 = vmor %vm951, %vm952
  %v954 = vsel %vm953, %v946, %v950
  %v955 = vand.u32 2147483647, %v945
  %vm956 = vcmp.eq.f32.partialorder %v955, 8.507059e+37
  %v957 = vand.u32 %v945, 2147483648
  %v958 = vor.u32 1.1754944e-38, %v957
  %v959 = vsel %vm956, %v958, %v954
  %v960 = vmul.f32 1.0, %v959
  %s961 = scalar_lea.vmem %s6, 48
  %962 = vst [vmem:[%s961] sm:$0xff] %v960
  %v963 = vld [vmem:[#allocation2] sm:$0xff]
  %v964 = vpack.c.bf16 %v963, %v963
  %s965 = scalar_lea.vmem [#allocation4], 56
  %v966 = vld [vmem:[%s965] sm:$0xff]
  %v968 = vsel %vm81, %v964, 0
  %970 = vmatpush.bf16.msra.mxu0 0
  %971 = vmatpush.bf16.msra.mxu0 0
  %972 = vmatpush.bf16.msra.mxu0 0
  %973 = vmatpush.bf16.msra.mxu0 0
  %974 = vmatpush.bf16.msra.mxu0 0
  %975 = vmatpush.bf16.msra.mxu0 0
  %976 = vmatpush.bf16.msra.mxu0 %v152
  %977 = vmatpush.bf16.msra.mxu0 %v151
  %978 = vmatmul.bf16.gmra.mxu0 %v968
  %v979 = vpop.f32.mrf.mxu0
  %v980 = vadd.f32 0.0, %v979
  %v981 = vpop.f32.mrf.mxu0
  %982 = vdwg.mxu0
  %v983 = vadd.f32 %v966, %v980
  %v984 = vxor.u32 %v983, 2147483648
  %v985 = vmul.f32 %v984, 1.442695
  %v986 = vpow.pop %v985
  %v987 = vadd.f32 %v986, 1.0
  %v988 = vrcp.pop %v987
  %v989 = vmul.f32 %v987, %v988
  %v990 = vsub.f32 1.0, %v989
  %v991 = vmul.f32 %v988, %v990
  %v992 = vadd.f32 %v988, %v991
  %vm993 = vweird.f32 %v987
  %vm994 = vweird.f32 %v988
  %vm995 = vmor %vm993, %vm994
  %v996 = vsel %vm995, %v988, %v992
  %v997 = vand.u32 2147483647, %v987
  %vm998 = vcmp.eq.f32.partialorder %v997, 8.507059e+37
  %v999 = vand.u32 %v987, 2147483648
  %v1000 = vor.u32 1.1754944e-38, %v999
  %v1001 = vsel %vm998, %v1000, %v996
  %v1002 = vmul.f32 1.0, %v1001
  %v1003 = vtanh.pop %v983
  %v1004 = vld [vmem:[#allocation3] sm:$0xff]
  %1006 = vrot.lane.b32.xlu0 %v1004, 32
  %v1007 = vpop.permute.xlu0 %1006
  %v1009 = vmul.f32 %v1002, %v1007
  %1011 = vrot.lane.b32.xlu0 %v1003, 32
  %v1012 = vpop.permute.xlu0 %1011
  %v1014 = vmul.f32 %v1002, %v1012
  %1016 = vrot.lane.b32.xlu0 %v1014, 32
  %v1017 = vpop.permute.xlu0 %1016
  %v1019 = vadd.f32 %v1009, %v1017
  %v1020 = vtanh.pop %v1019
  %1022 = vrot.lane.b32.xlu0 %v1020, 32
  %v1023 = vpop.permute.xlu0 %1022
  %v1025 = vmul.f32 %v1002, %v1023
  %1027 = vrot.lane.b32.xlu0 %v1019, 96
  %v1028 = vpop.permute.xlu0 %1027
  %1030 = vst.msk [vmem:[#allocation3] sm:$0xff] %vm81, %v1028
  %1032 = vrot.lane.b32.xlu0 %v1025, 64
  %v1033 = vpop.permute.xlu0 %1032
  %1035 = vst.msk [vmem:[#allocation2] sm:$0xff] %vm81, %v1033
  %v1036 = vpack.c.bf16 %v1025, %v1025
  %1038 = vrot.lane.b32.xlu0 %v1036, 64
  %v1039 = vpop.permute.xlu0 %1038
  %v1041 = vsel %vm81, %v1039, 0
  %1043 = vmatpush.bf16.msra.mxu0 0
  %1044 = vmatpush.bf16.msra.mxu0 0
  %1045 = vmatpush.bf16.msra.mxu0 0
  %1046 = vmatpush.bf16.msra.mxu0 0
  %1047 = vmatpush.bf16.msra.mxu0 0
  %1048 = vmatpush.bf16.msra.mxu0 0
  %1049 = vmatpush.bf16.msra.mxu0 %v240
  %1050 = vmatpush.bf16.msra.mxu0 %v239
  %1051 = vmatmul.bf16.gmra.mxu0 %v1041
  %v1052 = vpop.f32.mrf.mxu0
  %v1053 = vadd.f32 %v226, %v1052
  %v1054 = vpop.f32.mrf.mxu0
  %1055 = vdwg.mxu0
  %v1056 = vxor.u32 %v1053, 2147483648
  %v1057 = vmul.f32 %v1056, 1.442695
  %v1058 = vpow.pop %v1057
  %v1059 = vadd.f32 %v1058, 1.0
  %v1060 = vrcp.pop %v1059
  %v1061 = vmul.f32 %v1059, %v1060
  %v1062 = vsub.f32 1.0, %v1061
  %v1063 = vmul.f32 %v1060, %v1062
  %v1064 = vadd.f32 %v1060, %v1063
  %vm1065 = vweird.f32 %v1059
  %vm1066 = vweird.f32 %v1060
  %vm1067 = vmor %vm1065, %vm1066
  %v1068 = vsel %vm1067, %v1060, %v1064
  %v1069 = vand.u32 2147483647, %v1059
  %vm1070 = vcmp.eq.f32.partialorder %v1069, 8.507059e+37
  %v1071 = vand.u32 %v1059, 2147483648
  %v1072 = vor.u32 1.1754944e-38, %v1071
  %v1073 = vsel %vm1070, %v1072, %v1068
  %v1074 = vmul.f32 1.0, %v1073
  %s1075 = scalar_lea.vmem %s6, 56
  %1076 = vst [vmem:[%s1075] sm:$0xff] %v1074
  %v1077 = vld [vmem:[#allocation2] sm:$0xff]
  %1078 = vst.msk [vmem:[%s7] sm:$0xff] %vm81, %v1077
  // Predicated region
  $region30: #{decoder_forward.1} parent=0 // pred_check
    _
  $region31: #{decoder_forward.1} parent=0 // pred_check_branch
    %1080 = sbr.rel (0) target = $region33
  $region32: #{decoder_forward.1} parent=0 // pred_region
    _
  $region33: #{decoder_forward.1} parent=0 // pred_fallthru
    _
  // Predicated region
  $region34: #{decoder_forward.1} parent=0 // pred_check
    _
  $region35: #{decoder_forward.1} parent=0 // pred_check_branch
    %1082 = sbr.rel (0) target = $region37
  $region36: #{decoder_forward.1} parent=0 // pred_region
    _
  $region37: #{decoder_forward.1} parent=0 // pred_fallthru
    _
  // Predicated region
  $region38: #{decoder_forward.1} parent=0 // pred_check
    _
  $region39: #{decoder_forward.1} parent=0 // pred_check_branch
    %1084 = sbr.rel (0) target = $region41
  $region40: #{decoder_forward.1} parent=0 // pred_region
    _
  $region41: #{decoder_forward.1} parent=0 // pred_fallthru
    _
  // Predicated region
  $region42: #{decoder_forward.1} parent=0 // pred_check
    _
  $region43: #{decoder_forward.1} parent=0 // pred_check_branch
    %1086 = sbr.rel (0) target = $region45
  $region44: #{decoder_forward.1} parent=0 // pred_region
    _
  $region45: #{decoder_forward.1} parent=0 // pred_fallthru
    _

</llo_original>
